<compile_context>
chip_gen: v5e
topology: v5e:2x2
jax: 0.10.0
libtpu: 0.0.40
codegen_flags: <defaults>
</compile_context>

<pallas_src>
import functools

import jax
import jax.numpy as jnp
from jax.experimental import pallas as pl
from jax.experimental.pallas import tpu as pltpu


def _round_up(x, m):
    return (x + m - 1) // m * m


# ----------------------------------------------------------------------------
# Kernel: 9 per-tap MXU dots over a flattened window slab, f32 accumulation,
# fused bias + relu6, lane-dense store.
# ----------------------------------------------------------------------------
def _conv3x3_tap_kernel(x_ref, w_ref, b_ref, o_ref, *, width, rows_out):
    # x_ref : (rows_in, Cin)        flattened padded window (rows_in > rows_out + 2*(W+2)+2)
    # w_ref : (9, Cin, Cout_pad)    fused per-tap weights (VMEM resident across steps)
    # b_ref : (1, Cout_pad)         fused bias            (VMEM resident across steps)
    # o_ref : (rows_out, Cout_pad)  lane-dense "wide" output slab (W+2 cols per image row)
    wp = width + 2
    acc = None
    for kh in range(3):
        for kw in range(3):
            off = kh * wp + kw                       # static row offset of this tap
            tap = x_ref[off:off + rows_out, :]       # sublane-offset load (stays in VMEM)
            contrib = jnp.dot(tap, w_ref[3 * kh + kw],
                              preferred_element_type=jnp.float32)
            acc = contrib if acc is None else acc + contrib
    acc = acc + b_ref[...]                           # (1, Cout_pad) broadcasts over rows
    o_ref[...] = jnp.clip(acc, 0.0, 6.0).astype(o_ref.dtype)   # relu6


# ----------------------------------------------------------------------------
# Wrapper: NCHW in/out, halo pad + overlapping row windows, tiled pallas_call.
# ----------------------------------------------------------------------------
def repvgg_block_compact_forward(x_nchw, weight_oihw, bias, *,
                                 tile_h=None,
                                 compute_dtype=jnp.float32,
                                 vmem_budget_bytes=40 * 1024 * 1024):
    """relu6(conv2d_3x3_same(x, W, b)) with the PyTorch NCHW interface.

    tile_h:        H rows per grid step (auto-derived from the VMEM budget if
                   None; always rounded to a multiple of 8).
    compute_dtype: jnp.bfloat16 recommended on v6e/v7x (f32 accumulation is
                   kept either way); f32 default keeps bit-tight correctness.
    """
    N, Cin, H, W = map(int, x_nchw.shape)
    Cout = int(weight_oihw.shape[0])
    Cout_pad = _round_up(Cout, 128)
    out_dtype = x_nchw.dtype
    in_itemsize = jnp.dtype(compute_dtype).itemsize
    out_itemsize = jnp.dtype(out_dtype).itemsize
    wp = W + 2

    # ---- choose TH (output H-rows per grid step) from the VMEM budget -------
    def footprint(th):
        r_in = (th + 3) * wp
        r_out = th * wp
        cin_l = max(Cin, 8)
        x_blk = r_in * cin_l * in_itemsize            # input window block
        o_blk = r_out * Cout_pad * out_itemsize       # output block
        w_res = 9 * cin_l * Cout_pad * in_itemsize + Cout_pad * 4
        acc = r_out * Cout_pad * 4                    # f32 accumulator
        return 2 * x_blk + 2 * o_blk + 2 * w_res + acc   # 2x = double buffering

    if tile_h is None:
        th = _round_up(min(H, 256), 8)
        while th > 8 and footprint(th) > vmem_budget_bytes:
            th -= 8
    else:
        th = max(8, _round_up(int(tile_h), 8))
    # Keep both v7x TensorCores busy: make sure the grid has >= 2 steps.
    if N == 1 and th >= H and H > 8:
        th = _round_up(pl.cdiv(H, 2), 8)

    Hp = _round_up(H, th)
    nh = Hp // th
    r_in = (th + 3) * wp
    r_out = th * wp

    # ---- layout prep (plain XLA glue; no 9x im2col) --------------------------
    # NCHW -> NHWC (channels on lanes); halo pad: 1 top, (align + halo) bottom,
    # 1 left / 1 right.
    x_nhwc = jnp.transpose(x_nchw, (0, 2, 3, 1)).astype(compute_dtype)
    x_p = jnp.pad(x_nhwc, ((0, 0), (1, Hp - H + 2), (1, 1), (0, 0)))
    # Overlapping row windows (3-row halo), flattened to (rows, Cin) per window.
    x_win = jnp.stack([x_p[:, i * th:i * th + th + 3] for i in range(nh)], axis=1)
    x_flat = x_win.reshape(N, nh, r_in, Cin)

    # Per-tap weights: OIHW -> (kh, kw, Cin, Cout) -> (9, Cin, Cout_pad).
    w_taps = jnp.transpose(weight_oihw, (2, 3, 1, 0)).reshape(9, Cin, Cout)
    w_taps = jnp.pad(w_taps, ((0, 0), (0, 0), (0, Cout_pad - Cout))).astype(compute_dtype)
    b2 = jnp.pad(bias, (0, Cout_pad - Cout)).reshape(1, Cout_pad).astype(jnp.float32)

    # ---- pallas_call ----------------------------------------------------------
    kernel = functools.partial(_conv3x3_tap_kernel, width=W, rows_out=r_out)
    flops = 2 * N * nh * r_out * Cin * Cout_pad * 9
    bytes_accessed = (N * nh * r_in * Cin * in_itemsize
                      + 9 * Cin * Cout_pad * in_itemsize + Cout_pad * 4
                      + N * nh * r_out * Cout_pad * out_itemsize)
    vmem_limit = int(min(max(int(1.5 * footprint(th)), 16 * 1024 * 1024),
                         64 * 1024 * 1024))

    y = pl.pallas_call(
        kernel,
        out_shape=jax.ShapeDtypeStruct((N, nh, r_out, Cout_pad), out_dtype),
        grid_spec=pltpu.PrefetchScalarGridSpec(
            num_scalar_prefetch=0,
            grid=(N, nh),
            in_specs=[
                # Window slab: marches along (batch, row-tile).
                pl.BlockSpec((None, None, r_in, Cin), lambda n, i: (n, i, 0, 0)),
                # Fused per-tap weights / bias: constant index_map -> resident.
                # TODO(synk): on v7x, single-buffer (pl.Buffered(1)) + Cout-tile the
                # weights once 9*Cin*Cout_pad bytes is a noticeable VMEM fraction.
                pl.BlockSpec((9, Cin, Cout_pad), lambda n, i: (0, 0, 0)),
                pl.BlockSpec((1, Cout_pad), lambda n, i: (0, 0)),
            ],
            out_specs=pl.BlockSpec((None, None, r_out, Cout_pad),
                                   lambda n, i: (n, i, 0, 0)),
        ),
        compiler_params=pltpu.CompilerParams(
            dimension_semantics=("parallel", "parallel"),
            vmem_limit_bytes=vmem_limit,
        ),
        cost_estimate=pl.CostEstimate(flops=flops, transcendentals=0,
                                      bytes_accessed=bytes_accessed),
    )(x_flat, w_taps, b2)

    # ---- strip the wide / padded columns and restore NCHW ---------------------
    y = y.reshape(N, nh, th, wp, Cout_pad)[:, :, :, :W, :Cout]
    y = y.reshape(N, Hp, W, Cout)[:, :H]
    return jnp.transpose(y, (0, 3, 1, 2))


# ----------------------------------------------------------------------------
# Parameter fusion (mirrors RepVGGBlockCompact.__init__), plain JAX glue.
# ----------------------------------------------------------------------------
def build_fused_params(key, in_channels, out_channels, num_branches):
    """Returns fused (weight_oihw, bias) exactly like the PyTorch __init__."""
    keys = jax.random.split(key, 4 * num_branches)
    weight = jnp.zeros((out_channels, in_channels, 3, 3), jnp.float32)
    bias = jnp.zeros((out_channels,), jnp.float32)

    # 3x3 branches.
    for i in range(num_branches):
        w3 = jax.random.normal(keys[4 * i + 0],
                               (out_channels, in_channels, 3, 3),
                               jnp.float32) * 0.1
        b3 = jax.random.normal(keys[4 * i + 1], (out_channels,),
                               jnp.float32) * 0.1
        weight = weight + w3
        bias = bias + b3

    # 1x1 branches, zero-padded to 3x3 (centered).
    for i in range(num_branches):
        w1 = jax.random.normal(keys[4 * i + 2],
                               (out_channels, in_channels, 1, 1),
                               jnp.float32) * 0.1
        b1 = jax.random.normal(keys[4 * i + 3], (out_channels,),
                               jnp.float32) * 0.1
        weight = weight + jnp.pad(w1, ((0, 0), (0, 0), (1, 1), (1, 1)))
        bias = bias + b1

    # Identity branch when in_channels == out_channels.
    if in_channels == out_channels:
        w_id = jnp.zeros_like(weight)
        for o in range(out_channels):
            w_id = w_id.at[o, o % in_channels, 1, 1].set(1.0)
        weight = weight + w_id

    return weight, bias


if __name__ == "__main__":
    key = jax.random.PRNGKey(0)
    k_x, k_w = jax.random.split(key)

    # Small shapes consistent with the module: batch=2, channels=4, spatial=16.
    N, C, H, W = 2, 4, 16, 16
    in_channels = out_channels = C
    num_branches = 2

    x = jax.random.normal(k_x, (N, C, H, W), jnp.float32)
    weight, bias = build_fused_params(k_w, in_channels, out_channels,
                                      num_branches)

    fwd = jax.jit(repvgg_block_compact_forward)   # jit fuses the wrapper glue
    y = jax.block_until_ready(fwd(x, weight, bias))

    # Correctness check against XLA conv (same semantics as F.conv2d 'same').
    ref = jax.lax.conv_general_dilated(
        x, weight, window_strides=(1, 1), padding="SAME",
        dimension_numbers=("NCHW", "OIHW", "NCHW"),
        precision=jax.lax.Precision.HIGHEST)
    ref = jnp.clip(ref + bias.reshape(1, out_channels, 1, 1), 0.0, 6.0)

    assert y.shape == (N, out_channels, H, W)
    assert jnp.allclose(y, ref, atol=1e-4, rtol=1e-4), "mismatch vs reference"

    print("KERNEL_OK")
</pallas_src>

<mosaic_0001>
module attributes {stable_mosaic.version = 11 : i64} {
  func.func @_conv3x3_tap_kernel(%arg0: i32, %arg1: i32, %arg2: memref<1x1x342x4xf32, #tpu.memory_space<vmem>>, %arg3: memref<9x4x128xf32, #tpu.memory_space<vmem>>, %arg4: memref<1x128xf32, #tpu.memory_space<vmem>>, %arg5: memref<1x1x288x128xf32, #tpu.memory_space<vmem>>) attributes {dimension_semantics = [#tpu.dimension_semantics<parallel>, #tpu.dimension_semantics<parallel>], iteration_bounds = array<i64: 2, 1>, scalar_prefetch = 0 : i64, scratch_operands = 0 : i64, tpu.core_type = #tpu.core_type<tc>, window_params = [{transform_indices = @transform_0, window_bounds = array<i64: 1, 1, 342, 4>}, {pipeline_mode = #tpu.pipeline_mode<synchronous>, transform_indices = @transform_1, window_bounds = array<i64: 9, 4, 128>}, {pipeline_mode = #tpu.pipeline_mode<synchronous>, transform_indices = @transform_2, window_bounds = array<i64: 1, 128>}, {transform_indices = @transform_3, window_bounds = array<i64: 1, 1, 288, 128>}]} {
    %c0 = arith.constant 0 : index
    %c0_0 = arith.constant 0 : index
    %c0_1 = arith.constant 0 : index
    %c0_2 = arith.constant 0 : index
    %0 = vector.load %arg2[%c0, %c0_0, %c0_1, %c0_2] : memref<1x1x342x4xf32, #tpu.memory_space<vmem>>, vector<1x1x288x4xf32>
    %1 = vector.shape_cast %0 : vector<1x1x288x4xf32> to vector<288x4xf32>
    %c0_3 = arith.constant 0 : index
    %c0_4 = arith.constant 0 : index
    %c0_5 = arith.constant 0 : index
    %2 = vector.load %arg3[%c0_3, %c0_4, %c0_5] : memref<9x4x128xf32, #tpu.memory_space<vmem>>, vector<1x4x128xf32>
    %3 = vector.shape_cast %2 : vector<1x4x128xf32> to vector<4x128xf32>
    %cst = arith.constant dense<0.000000e+00> : vector<288x128xf32>
    %4 = tpu.matmul %1, %3, %cst {dimension_numbers = #tpu.dot_dimension_numbers<[1], [0], [0], [1], [0, 0, 1, 1], [], []>} : vector<288x4xf32>, vector<4x128xf32>, vector<288x128xf32> -> vector<288x128xf32>
    %c0_6 = arith.constant 0 : index
    %c0_7 = arith.constant 0 : index
    %c1 = arith.constant 1 : index
    %c0_8 = arith.constant 0 : index
    %5 = vector.load %arg2[%c0_6, %c0_7, %c1, %c0_8] : memref<1x1x342x4xf32, #tpu.memory_space<vmem>>, vector<1x1x288x4xf32>
    %6 = vector.shape_cast %5 : vector<1x1x288x4xf32> to vector<288x4xf32>
    %c1_9 = arith.constant 1 : index
    %c0_10 = arith.constant 0 : index
    %c0_11 = arith.constant 0 : index
    %7 = vector.load %arg3[%c1_9, %c0_10, %c0_11] : memref<9x4x128xf32, #tpu.memory_space<vmem>>, vector<1x4x128xf32>
    %8 = vector.shape_cast %7 : vector<1x4x128xf32> to vector<4x128xf32>
    %cst_12 = arith.constant dense<0.000000e+00> : vector<288x128xf32>
    %9 = tpu.matmul %6, %8, %cst_12 {dimension_numbers = #tpu.dot_dimension_numbers<[1], [0], [0], [1], [0, 0, 1, 1], [], []>} : vector<288x4xf32>, vector<4x128xf32>, vector<288x128xf32> -> vector<288x128xf32>
    %10 = arith.addf %4, %9 : vector<288x128xf32>
    %c0_13 = arith.constant 0 : index
    %c0_14 = arith.constant 0 : index
    %c2 = arith.constant 2 : index
    %c0_15 = arith.constant 0 : index
    %11 = vector.load %arg2[%c0_13, %c0_14, %c2, %c0_15] : memref<1x1x342x4xf32, #tpu.memory_space<vmem>>, vector<1x1x288x4xf32>
    %12 = vector.shape_cast %11 : vector<1x1x288x4xf32> to vector<288x4xf32>
    %c2_16 = arith.constant 2 : index
    %c0_17 = arith.constant 0 : index
    %c0_18 = arith.constant 0 : index
    %13 = vector.load %arg3[%c2_16, %c0_17, %c0_18] : memref<9x4x128xf32, #tpu.memory_space<vmem>>, vector<1x4x128xf32>
    %14 = vector.shape_cast %13 : vector<1x4x128xf32> to vector<4x128xf32>
    %cst_19 = arith.constant dense<0.000000e+00> : vector<288x128xf32>
    %15 = tpu.matmul %12, %14, %cst_19 {dimension_numbers = #tpu.dot_dimension_numbers<[1], [0], [0], [1], [0, 0, 1, 1], [], []>} : vector<288x4xf32>, vector<4x128xf32>, vector<288x128xf32> -> vector<288x128xf32>
    %16 = arith.addf %10, %15 : vector<288x128xf32>
    %c0_20 = arith.constant 0 : index
    %c0_21 = arith.constant 0 : index
    %c18 = arith.constant 18 : index
    %c0_22 = arith.constant 0 : index
    %17 = vector.load %arg2[%c0_20, %c0_21, %c18, %c0_22] : memref<1x1x342x4xf32, #tpu.memory_space<vmem>>, vector<1x1x288x4xf32>
    %18 = vector.shape_cast %17 : vector<1x1x288x4xf32> to vector<288x4xf32>
    %c3 = arith.constant 3 : index
    %c0_23 = arith.constant 0 : index
    %c0_24 = arith.constant 0 : index
    %19 = vector.load %arg3[%c3, %c0_23, %c0_24] : memref<9x4x128xf32, #tpu.memory_space<vmem>>, vector<1x4x128xf32>
    %20 = vector.shape_cast %19 : vector<1x4x128xf32> to vector<4x128xf32>
    %cst_25 = arith.constant dense<0.000000e+00> : vector<288x128xf32>
    %21 = tpu.matmul %18, %20, %cst_25 {dimension_numbers = #tpu.dot_dimension_numbers<[1], [0], [0], [1], [0, 0, 1, 1], [], []>} : vector<288x4xf32>, vector<4x128xf32>, vector<288x128xf32> -> vector<288x128xf32>
    %22 = arith.addf %16, %21 : vector<288x128xf32>
    %c0_26 = arith.constant 0 : index
    %c0_27 = arith.constant 0 : index
    %c19 = arith.constant 19 : index
    %c0_28 = arith.constant 0 : index
    %23 = vector.load %arg2[%c0_26, %c0_27, %c19, %c0_28] : memref<1x1x342x4xf32, #tpu.memory_space<vmem>>, vector<1x1x288x4xf32>
    %24 = vector.shape_cast %23 : vector<1x1x288x4xf32> to vector<288x4xf32>
    %c4 = arith.constant 4 : index
    %c0_29 = arith.constant 0 : index
    %c0_30 = arith.constant 0 : index
    %25 = vector.load %arg3[%c4, %c0_29, %c0_30] : memref<9x4x128xf32, #tpu.memory_space<vmem>>, vector<1x4x128xf32>
    %26 = vector.shape_cast %25 : vector<1x4x128xf32> to vector<4x128xf32>
    %cst_31 = arith.constant dense<0.000000e+00> : vector<288x128xf32>
    %27 = tpu.matmul %24, %26, %cst_31 {dimension_numbers = #tpu.dot_dimension_numbers<[1], [0], [0], [1], [0, 0, 1, 1], [], []>} : vector<288x4xf32>, vector<4x128xf32>, vector<288x128xf32> -> vector<288x128xf32>
    %28 = arith.addf %22, %27 : vector<288x128xf32>
    %c0_32 = arith.constant 0 : index
    %c0_33 = arith.constant 0 : index
    %c20 = arith.constant 20 : index
    %c0_34 = arith.constant 0 : index
    %29 = vector.load %arg2[%c0_32, %c0_33, %c20, %c0_34] : memref<1x1x342x4xf32, #tpu.memory_space<vmem>>, vector<1x1x288x4xf32>
    %30 = vector.shape_cast %29 : vector<1x1x288x4xf32> to vector<288x4xf32>
    %c5 = arith.constant 5 : index
    %c0_35 = arith.constant 0 : index
    %c0_36 = arith.constant 0 : index
    %31 = vector.load %arg3[%c5, %c0_35, %c0_36] : memref<9x4x128xf32, #tpu.memory_space<vmem>>, vector<1x4x128xf32>
    %32 = vector.shape_cast %31 : vector<1x4x128xf32> to vector<4x128xf32>
    %cst_37 = arith.constant dense<0.000000e+00> : vector<288x128xf32>
    %33 = tpu.matmul %30, %32, %cst_37 {dimension_numbers = #tpu.dot_dimension_numbers<[1], [0], [0], [1], [0, 0, 1, 1], [], []>} : vector<288x4xf32>, vector<4x128xf32>, vector<288x128xf32> -> vector<288x128xf32>
    %34 = arith.addf %28, %33 : vector<288x128xf32>
    %c0_38 = arith.constant 0 : index
    %c0_39 = arith.constant 0 : index
    %c36 = arith.constant 36 : index
    %c0_40 = arith.constant 0 : index
    %35 = vector.load %arg2[%c0_38, %c0_39, %c36, %c0_40] : memref<1x1x342x4xf32, #tpu.memory_space<vmem>>, vector<1x1x288x4xf32>
    %36 = vector.shape_cast %35 : vector<1x1x288x4xf32> to vector<288x4xf32>
    %c6 = arith.constant 6 : index
    %c0_41 = arith.constant 0 : index
    %c0_42 = arith.constant 0 : index
    %37 = vector.load %arg3[%c6, %c0_41, %c0_42] : memref<9x4x128xf32, #tpu.memory_space<vmem>>, vector<1x4x128xf32>
    %38 = vector.shape_cast %37 : vector<1x4x128xf32> to vector<4x128xf32>
    %cst_43 = arith.constant dense<0.000000e+00> : vector<288x128xf32>
    %39 = tpu.matmul %36, %38, %cst_43 {dimension_numbers = #tpu.dot_dimension_numbers<[1], [0], [0], [1], [0, 0, 1, 1], [], []>} : vector<288x4xf32>, vector<4x128xf32>, vector<288x128xf32> -> vector<288x128xf32>
    %40 = arith.addf %34, %39 : vector<288x128xf32>
    %c0_44 = arith.constant 0 : index
    %c0_45 = arith.constant 0 : index
    %c37 = arith.constant 37 : index
    %c0_46 = arith.constant 0 : index
    %41 = vector.load %arg2[%c0_44, %c0_45, %c37, %c0_46] : memref<1x1x342x4xf32, #tpu.memory_space<vmem>>, vector<1x1x288x4xf32>
    %42 = vector.shape_cast %41 : vector<1x1x288x4xf32> to vector<288x4xf32>
    %c7 = arith.constant 7 : index
    %c0_47 = arith.constant 0 : index
    %c0_48 = arith.constant 0 : index
    %43 = vector.load %arg3[%c7, %c0_47, %c0_48] : memref<9x4x128xf32, #tpu.memory_space<vmem>>, vector<1x4x128xf32>
    %44 = vector.shape_cast %43 : vector<1x4x128xf32> to vector<4x128xf32>
    %cst_49 = arith.constant dense<0.000000e+00> : vector<288x128xf32>
    %45 = tpu.matmul %42, %44, %cst_49 {dimension_numbers = #tpu.dot_dimension_numbers<[1], [0], [0], [1], [0, 0, 1, 1], [], []>} : vector<288x4xf32>, vector<4x128xf32>, vector<288x128xf32> -> vector<288x128xf32>
    %46 = arith.addf %40, %45 : vector<288x128xf32>
    %c0_50 = arith.constant 0 : index
    %c0_51 = arith.constant 0 : index
    %c38 = arith.constant 38 : index
    %c0_52 = arith.constant 0 : index
    %47 = vector.load %arg2[%c0_50, %c0_51, %c38, %c0_52] : memref<1x1x342x4xf32, #tpu.memory_space<vmem>>, vector<1x1x288x4xf32>
    %48 = vector.shape_cast %47 : vector<1x1x288x4xf32> to vector<288x4xf32>
    %c8 = arith.constant 8 : index
    %c0_53 = arith.constant 0 : index
    %c0_54 = arith.constant 0 : index
    %49 = vector.load %arg3[%c8, %c0_53, %c0_54] : memref<9x4x128xf32, #tpu.memory_space<vmem>>, vector<1x4x128xf32>
    %50 = vector.shape_cast %49 : vector<1x4x128xf32> to vector<4x128xf32>
    %cst_55 = arith.constant dense<0.000000e+00> : vector<288x128xf32>
    %51 = tpu.matmul %48, %50, %cst_55 {dimension_numbers = #tpu.dot_dimension_numbers<[1], [0], [0], [1], [0, 0, 1, 1], [], []>} : vector<288x4xf32>, vector<4x128xf32>, vector<288x128xf32> -> vector<288x128xf32>
    %52 = arith.addf %46, %51 : vector<288x128xf32>
    %c0_56 = arith.constant 0 : index
    %c0_57 = arith.constant 0 : index
    %53 = vector.load %arg4[%c0_56, %c0_57] : memref<1x128xf32, #tpu.memory_space<vmem>>, vector<1x128xf32>
    %54 = vector.broadcast %53 : vector<1x128xf32> to vector<288x128xf32>
    %55 = arith.addf %52, %54 : vector<288x128xf32>
    %cst_58 = arith.constant 0.000000e+00 : f32
    %cst_59 = arith.constant 6.000000e+00 : f32
    %56 = vector.broadcast %cst_58 : f32 to vector<288x128xf32>
    %57 = arith.maximumf %56, %55 : vector<288x128xf32>
    %58 = vector.broadcast %cst_59 : f32 to vector<288x128xf32>
    %59 = arith.minimumf %58, %57 : vector<288x128xf32>
    %c0_60 = arith.constant 0 : index
    %c0_61 = arith.constant 0 : index
    %c0_62 = arith.constant 0 : index
    %c0_63 = arith.constant 0 : index
    %60 = vector.load %arg5[%c0_60, %c0_61, %c0_62, %c0_63] : memref<1x1x288x128xf32, #tpu.memory_space<vmem>>, vector<1x1x288x128xf32>
    %61 = vector.shape_cast %60 : vector<1x1x288x128xf32> to vector<288x128xf32>
    %62 = vector.shape_cast %59 : vector<288x128xf32> to vector<1x1x288x128xf32>
    tpu.vector_store %arg5[%c0_60, %c0_61, %c0_62, %c0_63], %62 {strides = array<i32>} : memref<1x1x288x128xf32, #tpu.memory_space<vmem>>, vector<1x1x288x128xf32>,
    return
  }
  func.func @transform_0(%arg0: i32, %arg1: i32) -> (i32, i32, i32, i32) {
    %c0_i32 = arith.constant 0 : i32
    %c0_i32_0 = arith.constant 0 : i32
    %c0_i32_1 = arith.constant 0 : i32
    return %arg0, %arg1, %c0_i32, %c0_i32_0 : i32, i32, i32, i32
  }
  func.func @transform_1(%arg0: i32, %arg1: i32) -> (i32, i32, i32) {
    %c0_i32 = arith.constant 0 : i32
    %c0_i32_0 = arith.constant 0 : i32
    %c0_i32_1 = arith.constant 0 : i32
    %c0_i32_2 = arith.constant 0 : i32
    return %c0_i32, %c0_i32_0, %c0_i32_1 : i32, i32, i32
  }
  func.func @transform_2(%arg0: i32, %arg1: i32) -> (i32, i32) {
    %c0_i32 = arith.constant 0 : i32
    %c0_i32_0 = arith.constant 0 : i32
    %c0_i32_1 = arith.constant 0 : i32
    return %c0_i32, %c0_i32_0 : i32, i32
  }
  func.func @transform_3(%arg0: i32, %arg1: i32) -> (i32, i32, i32, i32) {
    %c0_i32 = arith.constant 0 : i32
    %c0_i32_0 = arith.constant 0 : i32
    %c0_i32_1 = arith.constant 0 : i32
    return %arg0, %arg1, %c0_i32, %c0_i32_0 : i32, i32, i32, i32
  }
}

</mosaic_0001>

<llo_original>
// kernel: repvgg_block_compact_forward.1
$region0: #{repvgg_block_compact_forward.1}
  #allocation0 [shape = 'u32[]', space=smem, size = 0x4, offset = 0x4, fixed_abs, tag = 'smem constant byte address 0x4 - core index']
  #allocation1 [shape = 'u32[72,128]{1,0:T(1,128)}', space=vmem, size = 0x9000, scoped, tag = 'internal scratch']
  %s0 = inlined_call_operand.vmem [shape: f32[2,1,342,4], index: 0, kind: input, shape index: {}]
  %s1 = inlined_call_operand.vmem [shape: f32[9,4,128], index: 1, kind: input, shape index: {}]
  %s2 = inlined_call_operand.vmem [shape: f32[1,128], index: 2, kind: input, shape index: {}]
  %s3 = inlined_call_operand.vmem [shape: f32[2,1,288,128], index: 3, kind: output, shape index: {}]
  %s4 = sld [smem:[#allocation0]]
  $region45: #{repvgg_block_compact_forward.1} parent=0
    _
  %s6 = ssub.s32 1, %s4
  %s7 = scalar_select 0, %s6, %s4
  loop: start=0, step=1, limit=4
  $region2: #{repvgg_block_compact_forward.1} parent=0 // loop_pre_header
    _
  $region3: #{repvgg_block_compact_forward.1} parent=0 // loop_header
    %s9 = sphi 0, %s13
    %p10 = scmp.ge.s32.totalorder %s9, 4
    %s16 = sphi 0, %s28
    %s17 = sphi 0, %s24
    %s18 = sphi 0, %s16
    %s19 = sphi 0, %s17
    %s20 = sphi 0, %s18
    %s21 = sphi 0, %s19
    %s33 = sphi 0, %s35
    %s36 = sphi 0, %s33
    %s37 = sphi 0, %s36
    %s53 = sphi 0, %s37
    %s57 = sphi 0, %s57
    %s59 = sphi 0, %s57
    %s60 = sphi 0, %s59
    %s74 = sphi 0, %s60
    %s78 = sphi 0, %s78
    %s80 = sphi 0, %s78
    %s81 = sphi 0, %s80
    %s95 = sphi 0, %s81
    %s103 = sphi 0, %s105
    %s106 = sphi 0, %s103
    %s107 = sphi 0, %s106
    %s123 = sphi 0, %s107
  $region4: #{repvgg_block_compact_forward.1} parent=0 // loop_header_branch
    %12 = sbr.rel (%p10) target = $region8
  $region5: #{repvgg_block_compact_forward.1} parent=0 // loop_body
    %s14 = ssub.s32 %s9, 1
    %s15 = ssub.s32 %s9, 2
    %s22 = sadd.s32 1, %s17
    %p23 = scmp.ge.s32.totalorder %s22, 1
    %s24 = scalar_select %p23, 0, %s22
    %s25 = sadd.s32 1, %s16
    %s26 = scalar_select %p23, %s25, %s16
    %p27 = scmp.ge.s32.totalorder %s26, 2
    %s28 = scalar_select %p27, 0, %s26
    %s29 = ssub.s32 %s16, %s28
    %s30 = ssub.s32 %s17, %s24
    %s31 = sor.u32 %s29, %s30
    %p32 = scmp.eq.s32.totalorder %s31, 0
    %s34 = sadd.s32 %s33, 1
    %s35 = scalar_select %p32, %s33, %s34
    %p38 = pneg %p32
    %p39 = scmp.eq.s32.totalorder %s9, 1
    %p40 = por %p38, %p39
    %p41 = scmp.ne.s32.totalorder %s33, %s36
    %p42 = scmp.eq.s32.totalorder %s9, 0
    %p43 = por %p41, %p42
    %p44 = scmp.ne.s32.totalorder %s33, %s36
    %p45 = scmp.eq.s32.totalorder %s14, 1
    %p46 = por %p44, %p45
    %p47 = scmp.ne.s32.totalorder %s36, %s37
    %p48 = scmp.eq.s32.totalorder %s14, 0
    %p49 = por %p47, %p48
    %p50 = scmp.ne.s32.totalorder %s36, %s37
    %p51 = scmp.eq.s32.totalorder %s15, 1
    %p52 = por %p50, %p51
    %p54 = scmp.ne.s32.totalorder %s37, %s53
    %p55 = scmp.eq.s32.totalorder %s15, 0
    %p56 = por %p54, %p55
    %s58 = sadd.s32 %s57, 1
    %p61 = scmp.eq.s32.totalorder %s9, 1
    %p62 = scmp.ne.s32.totalorder %s57, %s59
    %p63 = scmp.eq.s32.totalorder %s9, 0
    %p64 = por %p62, %p63
    %p65 = scmp.ne.s32.totalorder %s57, %s59
    %p66 = scmp.eq.s32.totalorder %s14, 1
    %p67 = por %p65, %p66
    %p68 = scmp.ne.s32.totalorder %s59, %s60
    %p69 = scmp.eq.s32.totalorder %s14, 0
    %p70 = por %p68, %p69
    %p71 = scmp.ne.s32.totalorder %s59, %s60
    %p72 = scmp.eq.s32.totalorder %s15, 1
    %p73 = por %p71, %p72
    %p75 = scmp.ne.s32.totalorder %s60, %s74
    %p76 = scmp.eq.s32.totalorder %s15, 0
    %p77 = por %p75, %p76
    %s79 = sadd.s32 %s78, 1
    %p82 = scmp.eq.s32.totalorder %s9, 1
    %p83 = scmp.ne.s32.totalorder %s78, %s80
    %p84 = scmp.eq.s32.totalorder %s9, 0
    %p85 = por %p83, %p84
    %p86 = scmp.ne.s32.totalorder %s78, %s80
    %p87 = scmp.eq.s32.totalorder %s14, 1
    %p88 = por %p86, %p87
    %p89 = scmp.ne.s32.totalorder %s80, %s81
    %p90 = scmp.eq.s32.totalorder %s14, 0
    %p91 = por %p89, %p90
    %p92 = scmp.ne.s32.totalorder %s80, %s81
    %p93 = scmp.eq.s32.totalorder %s15, 1
    %p94 = por %p92, %p93
    %p96 = scmp.ne.s32.totalorder %s81, %s95
    %p97 = scmp.eq.s32.totalorder %s15, 0
    %p98 = por %p96, %p97
    %s99 = ssub.s32 %s16, %s28
    %s100 = ssub.s32 %s17, %s24
    %s101 = sor.u32 %s99, %s100
    %p102 = scmp.eq.s32.totalorder %s101, 0
    %s104 = sadd.s32 %s103, 1
    %s105 = scalar_select %p102, %s103, %s104
    %p108 = pneg %p102
    %p109 = scmp.eq.s32.totalorder %s9, 1
    %p110 = por %p108, %p109
    %p111 = scmp.ne.s32.totalorder %s103, %s106
    %p112 = scmp.eq.s32.totalorder %s9, 0
    %p113 = por %p111, %p112
    %p114 = scmp.ne.s32.totalorder %s103, %s106
    %p115 = scmp.eq.s32.totalorder %s14, 1
    %p116 = por %p114, %p115
    %p117 = scmp.ne.s32.totalorder %s106, %s107
    %p118 = scmp.eq.s32.totalorder %s14, 0
    %p119 = por %p117, %p118
    %p120 = scmp.ne.s32.totalorder %s106, %s107
    %p121 = scmp.eq.s32.totalorder %s15, 1
    %p122 = por %p120, %p121
    %p124 = scmp.ne.s32.totalorder %s107, %s123
    %p125 = scmp.eq.s32.totalorder %s15, 0
    %p126 = por %p124, %p125
    %p127 = scmp.le.s32.totalorder 1, %s9
    %p128 = scmp.lt.s32.totalorder %s9, 3
    %p129 = pnand %p127, %p128
    %p130 = pneg %p129
    // Predicated region
    $region9: #{repvgg_block_compact_forward.1} parent=5 // pred_check
      _
    $region10: #{repvgg_block_compact_forward.1} parent=5 // pred_check_branch
      %132 = sbr.rel (%p129) target = $region12
    $region11: #{repvgg_block_compact_forward.1} parent=5 // pred_region
      %s133 = ssub.s32 %s9, 1
      // Predicated region
      $region13: #{repvgg_block_compact_forward.1} parent=11 // pred_check
        %p134 = pneg %p70
      $region14: #{repvgg_block_compact_forward.1} parent=11 // pred_check_branch
        %136 = sbr.rel (%p134) target = $region16
      $region15: #{repvgg_block_compact_forward.1} parent=11 // pred_region
        _
      $region16: #{repvgg_block_compact_forward.1} parent=11 // pred_fallthru
        _
      // Predicated region
      $region17: #{repvgg_block_compact_forward.1} parent=11 // pred_check
        %p137 = pneg %p91
      $region18: #{repvgg_block_compact_forward.1} parent=11 // pred_check_branch
        %139 = sbr.rel (%p137) target = $region20
      $region19: #{repvgg_block_compact_forward.1} parent=11 // pred_region
        _
      $region20: #{repvgg_block_compact_forward.1} parent=11 // pred_fallthru
        _
    $region12: #{repvgg_block_compact_forward.1} parent=5 // pred_fallthru
      _
    %p140 = scmp.lt.s32.totalorder %s9, 2
    // Predicated region
    $region21: #{repvgg_block_compact_forward.1} parent=5 // pred_check
      %p141 = pneg %p140
    $region22: #{repvgg_block_compact_forward.1} parent=5 // pred_check_branch
      %143 = sbr.rel (%p141) target = $region24
    $region23: #{repvgg_block_compact_forward.1} parent=5 // pred_region
      // Predicated region
      $region25: #{repvgg_block_compact_forward.1} parent=23 // pred_check
        %p144 = pneg %p43
      $region26: #{repvgg_block_compact_forward.1} parent=23 // pred_check_branch
        %146 = sbr.rel (%p144) target = $region28
      $region27: #{repvgg_block_compact_forward.1} parent=23 // pred_region
        %p147 = scmp.lt.s32.totalorder %s16, 1
        %s148 = scalar_select %p147, %s16, 1
        %p149 = scmp.lt.s32.totalorder %s17, 0
        %s150 = scalar_select %p149, %s17, 0
        %s151 = smul.addr %s150, 43
        %s152 = smul.addr %s148, 43
        %s153 = sadd.s32 %s151, %s152
        %s154 = smul.addr %s153, 8
        %s155 = scalar_lea.vmem %s0, %s154
      $region28: #{repvgg_block_compact_forward.1} parent=23 // pred_fallthru
        _
    $region24: #{repvgg_block_compact_forward.1} parent=5 // pred_fallthru
      _
    %p156 = scmp.le.s32.totalorder 1, %s9
    %p157 = scmp.lt.s32.totalorder %s9, 3
    %p158 = pnand %p156, %p157
    %p159 = pneg %p158
    // Predicated region
    $region29: #{repvgg_block_compact_forward.1} parent=5 // pred_check
      _
    $region30: #{repvgg_block_compact_forward.1} parent=5 // pred_check_branch
      %161 = sbr.rel (%p158) target = $region32
    $region31: #{repvgg_block_compact_forward.1} parent=5 // pred_region
      %s162 = ssub.s32 %s9, 1
      %p163 = scmp.lt.s32.totalorder %s18, 1
      %s164 = scalar_select %p163, %s18, 1
      %p165 = scmp.lt.s32.totalorder %s19, 0
      %s166 = scalar_select %p165, %s19, 0
      %s167 = smul.addr %s166, 43
      %s168 = smul.addr %s164, 43
      %s169 = sadd.s32 %s167, %s168
      %s170 = smul.addr %s169, 8
      %s171 = scalar_lea.vmem %s0, %s170
      %p172 = pneg %p49
      %p173 = pneg %p46
      %p174 = pneg %p70
      %p175 = pneg %p67
      %p176 = pneg %p91
      %p177 = pneg %p88
      %p178 = pneg %p119
      %p179 = pneg %p116
      %p180 = scmp.lt.s32.totalorder %s18, 1
      %s181 = scalar_select %p180, %s18, 1
      %p182 = scmp.lt.s32.totalorder %s19, 0
      %s183 = scalar_select %p182, %s19, 0
      %s184 = smul.addr %s183, 36
      %s185 = smul.addr %s181, 36
      %s186 = sadd.s32 %s184, %s185
      %s187 = smul.addr %s186, 8
      %s188 = scalar_lea.vmem %s3, %s187
      %p189 = scmp.lt.s32.totalorder %s18, 1
      %s190 = scalar_select %p189, %s18, 1
      %p191 = scmp.lt.s32.totalorder %s19, 0
      %s192 = scalar_select %p191, %s19, 0
      %s193 = smul.addr %s192, 43
      %s194 = smul.addr %s190, 43
      %s195 = sadd.s32 %s193, %s194
      %s196 = smul.addr %s195, 8
      %s197 = scalar_lea.vmem %s0, %s196
      %p198 = scmp.lt.s32.totalorder %s18, 1
      %s199 = scalar_select %p198, %s18, 1
      %p200 = scmp.lt.s32.totalorder %s19, 0
      %s201 = scalar_select %p200, %s19, 0
      %s202 = smul.addr %s201, 36
      %s203 = smul.addr %s199, 36
      %s204 = sadd.s32 %s202, %s203
      %s205 = smul.addr %s204, 8
      %s206 = scalar_lea.vmem %s3, %s205
      %v207 = vld [vmem:[%s197] sm:$0xff]
      %v208 = vld [vmem:[%s197 + $0x8] sm:$0xff]
      %v209 = vld [vmem:[%s197 + $0x10] sm:$0xff]
      %v210 = vld [vmem:[%s197 + $0x18] sm:$0xff]
      %v211 = vld [vmem:[%s197 + $0x20] sm:$0xff]
      %v212 = vld [vmem:[%s197 + $0x28] sm:$0xff]
      %v213 = vld [vmem:[%s197 + $0x30] sm:$0xff]
      %v214 = vld [vmem:[%s197 + $0x38] sm:$0xff]
      %v215 = vld [vmem:[%s197 + $0x40] sm:$0xff]
      %v216 = vld [vmem:[%s197 + $0x48] sm:$0xff]
      %v217 = vld [vmem:[%s197 + $0x50] sm:$0xff]
      %v218 = vld [vmem:[%s197 + $0x58] sm:$0xff]
      %v219 = vld [vmem:[%s197 + $0x60] sm:$0xff]
      %v220 = vld [vmem:[%s197 + $0x68] sm:$0xff]
      %v221 = vld [vmem:[%s197 + $0x70] sm:$0xff]
      %v222 = vld [vmem:[%s197 + $0x78] sm:$0xff]
      %v223 = vld [vmem:[%s197 + $0x80] sm:$0xff]
      %v224 = vld [vmem:[%s197 + $0x88] sm:$0xff]
      %v225 = vld [vmem:[%s197 + $0x90] sm:$0xff]
      %v226 = vld [vmem:[%s197 + $0x98] sm:$0xff]
      %v227 = vld [vmem:[%s197 + $0xa0] sm:$0xff]
      %v228 = vld [vmem:[%s197 + $0xa8] sm:$0xff]
      %v229 = vld [vmem:[%s197 + $0xb0] sm:$0xff]
      %v230 = vld [vmem:[%s197 + $0xb8] sm:$0xff]
      %v231 = vld [vmem:[%s197 + $0xc0] sm:$0xff]
      %v232 = vld [vmem:[%s197 + $0xc8] sm:$0xff]
      %v233 = vld [vmem:[%s197 + $0xd0] sm:$0xff]
      %v234 = vld [vmem:[%s197 + $0xd8] sm:$0xff]
      %v235 = vld [vmem:[%s197 + $0xe0] sm:$0xff]
      %v236 = vld [vmem:[%s197 + $0xe8] sm:$0xff]
      %v237 = vld [vmem:[%s197 + $0xf0] sm:$0xff]
      %v238 = vld [vmem:[%s197 + $0xf8] sm:$0xff]
      %v239 = vld [vmem:[%s197 + $0x100] sm:$0xff]
      %v240 = vld [vmem:[%s197 + $0x108] sm:$0xff]
      %v241 = vld [vmem:[%s197 + $0x110] sm:$0xff]
      %v242 = vld [vmem:[%s197 + $0x118] sm:$0xff]
      %v243 = vld [vmem:[%s1] sm:$0xf]
      %v244 = vld [vmem:[%s197 + $0x1] sm:$0xff]
      %v245 = vld [vmem:[%s197 + $0x9] sm:$0xff]
      %v246 = vld [vmem:[%s197 + $0x11] sm:$0xff]
      %v247 = vld [vmem:[%s197 + $0x19] sm:$0xff]
      %v248 = vld [vmem:[%s197 + $0x21] sm:$0xff]
      %v249 = vld [vmem:[%s197 + $0x29] sm:$0xff]
      %v250 = vld [vmem:[%s197 + $0x31] sm:$0xff]
      %v251 = vld [vmem:[%s197 + $0x39] sm:$0xff]
      %v252 = vld [vmem:[%s197 + $0x41] sm:$0xff]
      %v253 = vld [vmem:[%s197 + $0x49] sm:$0xff]
      %v254 = vld [vmem:[%s197 + $0x51] sm:$0xff]
      %v255 = vld [vmem:[%s197 + $0x59] sm:$0xff]
      %v256 = vld [vmem:[%s197 + $0x61] sm:$0xff]
      %v257 = vld [vmem:[%s197 + $0x69] sm:$0xff]
      %v258 = vld [vmem:[%s197 + $0x71] sm:$0xff]
      %v259 = vld [vmem:[%s197 + $0x79] sm:$0xff]
      %v260 = vld [vmem:[%s197 + $0x81] sm:$0xff]
      %v261 = vld [vmem:[%s197 + $0x89] sm:$0xff]
      %v262 = vld [vmem:[%s197 + $0x91] sm:$0xff]
      %v263 = vld [vmem:[%s197 + $0x99] sm:$0xff]
      %v264 = vld [vmem:[%s197 + $0xa1] sm:$0xff]
      %v265 = vld [vmem:[%s197 + $0xa9] sm:$0xff]
      %v266 = vld [vmem:[%s197 + $0xb1] sm:$0xff]
      %v267 = vld [vmem:[%s197 + $0xb9] sm:$0xff]
      %v268 = vld [vmem:[%s197 + $0xc1] sm:$0xff]
      %v269 = vld [vmem:[%s197 + $0xc9] sm:$0xff]
      %v270 = vld [vmem:[%s197 + $0xd1] sm:$0xff]
      %v271 = vld [vmem:[%s197 + $0xd9] sm:$0xff]
      %v272 = vld [vmem:[%s197 + $0xe1] sm:$0xff]
      %v273 = vld [vmem:[%s197 + $0xe9] sm:$0xff]
      %v274 = vld [vmem:[%s197 + $0xf1] sm:$0xff]
      %v275 = vld [vmem:[%s197 + $0xf9] sm:$0xff]
      %v276 = vld [vmem:[%s197 + $0x101] sm:$0xff]
      %v277 = vld [vmem:[%s197 + $0x109] sm:$0xff]
      %v278 = vld [vmem:[%s197 + $0x111] sm:$0xff]
      %v279 = vld [vmem:[%s197 + $0x119] sm:$0xff]
      %s280 = scalar_lea.vmem %s1, 4
      %v281 = vld [vmem:[%s280] sm:$0xf]
      %vm282 = vcmask 31744
      %v284 = vsel %vm282, %v244, 0
      %v287 = vsel %vm282, %v245, 0
      %v290 = vsel %vm282, %v246, 0
      %v293 = vsel %vm282, %v247, 0
      %v296 = vsel %vm282, %v248, 0
      %v299 = vsel %vm282, %v249, 0
      %v302 = vsel %vm282, %v250, 0
      %v305 = vsel %vm282, %v251, 0
      %v308 = vsel %vm282, %v252, 0
      %v311 = vsel %vm282, %v253, 0
      %v314 = vsel %vm282, %v254, 0
      %v317 = vsel %vm282, %v255, 0
      %v320 = vsel %vm282, %v256, 0
      %v323 = vsel %vm282, %v257, 0
      %v326 = vsel %vm282, %v258, 0
      %v329 = vsel %vm282, %v259, 0
      %v332 = vsel %vm282, %v260, 0
      %v335 = vsel %vm282, %v261, 0
      %v338 = vsel %vm282, %v262, 0
      %v341 = vsel %vm282, %v263, 0
      %v344 = vsel %vm282, %v264, 0
      %v347 = vsel %vm282, %v265, 0
      %v350 = vsel %vm282, %v266, 0
      %v353 = vsel %vm282, %v267, 0
      %v356 = vsel %vm282, %v268, 0
      %v359 = vsel %vm282, %v269, 0
      %v362 = vsel %vm282, %v270, 0
      %v365 = vsel %vm282, %v271, 0
      %v368 = vsel %vm282, %v272, 0
      %v371 = vsel %vm282, %v273, 0
      %v374 = vsel %vm282, %v274, 0
      %v377 = vsel %vm282, %v275, 0
      %v380 = vsel %vm282, %v276, 0
      %v383 = vsel %vm282, %v277, 0
      %v386 = vsel %vm282, %v278, 0
      %v389 = vsel %vm282, %v279, 0
      %vm391 = vcmask 1043456
      %v393 = vsel %vm391, %v281, 0
      %395 = vmatpush.msra.mxu0 0.0
      %396 = vmatpush.msra.mxu0 0.0
      %397 = vmatpush.msra.mxu0 0.0
      %398 = vmatpush.msra.mxu0 0.0
      %399 = vmatpush.msra.mxu0 0.0
      %400 = vmatpush.msra.mxu0 0.0
      %401 = vmatpush.msra.mxu0 0.0
      %402 = vmatpush.msra.mxu0 0.0
      %403 = vmatpush.msra.mxu0 0.0
      %404 = vmatpush.msra.mxu0 0.0
      %405 = vmatpush.msra.mxu0 0.0
      %406 = vmatpush.msra.mxu0 0.0
      %407 = vmatpush.msra.mxu0 0.0
      %408 = vmatpush.msra.mxu0 0.0
      %409 = vmatpush.msra.mxu0 0.0
      %410 = vmatpush.msra.mxu0 %v393
      %411 = vmatmul.f32.gmra.mxu0 %v284
      %v412 = vpop.f32.mrf.mxu0
      %v413 = vadd.f32 0.0, %v412
      %414 = vmatmul.f32.gmra.mxu0 %v287
      %v415 = vpop.f32.mrf.mxu0
      %v416 = vadd.f32 0.0, %v415
      %417 = vmatmul.f32.gmra.mxu0 %v290
      %v418 = vpop.f32.mrf.mxu0
      %v419 = vadd.f32 0.0, %v418
      %420 = vmatmul.f32.gmra.mxu0 %v293
      %v421 = vpop.f32.mrf.mxu0
      %v422 = vadd.f32 0.0, %v421
      %423 = vmatmul.f32.gmra.mxu0 %v296
      %v424 = vpop.f32.mrf.mxu0
      %v425 = vadd.f32 0.0, %v424
      %426 = vmatmul.f32.gmra.mxu0 %v299
      %v427 = vpop.f32.mrf.mxu0
      %v428 = vadd.f32 0.0, %v427
      %429 = vmatmul.f32.gmra.mxu0 %v302
      %v430 = vpop.f32.mrf.mxu0
      %v431 = vadd.f32 0.0, %v430
      %432 = vmatmul.f32.gmra.mxu0 %v305
      %v433 = vpop.f32.mrf.mxu0
      %v434 = vadd.f32 0.0, %v433
      %435 = vmatmul.f32.gmra.mxu0 %v308
      %v436 = vpop.f32.mrf.mxu0
      %v437 = vadd.f32 0.0, %v436
      %438 = vmatmul.f32.gmra.mxu0 %v311
      %v439 = vpop.f32.mrf.mxu0
      %v440 = vadd.f32 0.0, %v439
      %441 = vmatmul.f32.gmra.mxu0 %v314
      %v442 = vpop.f32.mrf.mxu0
      %v443 = vadd.f32 0.0, %v442
      %444 = vmatmul.f32.gmra.mxu0 %v317
      %v445 = vpop.f32.mrf.mxu0
      %v446 = vadd.f32 0.0, %v445
      %447 = vmatmul.f32.gmra.mxu0 %v320
      %v448 = vpop.f32.mrf.mxu0
      %v449 = vadd.f32 0.0, %v448
      %450 = vmatmul.f32.gmra.mxu0 %v323
      %v451 = vpop.f32.mrf.mxu0
      %v452 = vadd.f32 0.0, %v451
      %453 = vmatmul.f32.gmra.mxu0 %v326
      %v454 = vpop.f32.mrf.mxu0
      %v455 = vadd.f32 0.0, %v454
      %456 = vmatmul.f32.gmra.mxu0 %v329
      %v457 = vpop.f32.mrf.mxu0
      %v458 = vadd.f32 0.0, %v457
      %459 = vmatmul.f32.gmra.mxu0 %v332
      %v460 = vpop.f32.mrf.mxu0
      %v461 = vadd.f32 0.0, %v460
      %462 = vmatmul.f32.gmra.mxu0 %v335
      %v463 = vpop.f32.mrf.mxu0
      %v464 = vadd.f32 0.0, %v463
      %465 = vmatmul.f32.gmra.mxu0 %v338
      %v466 = vpop.f32.mrf.mxu0
      %v467 = vadd.f32 0.0, %v466
      %468 = vmatmul.f32.gmra.mxu0 %v341
      %v469 = vpop.f32.mrf.mxu0
      %v470 = vadd.f32 0.0, %v469
      %471 = vmatmul.f32.gmra.mxu0 %v344
      %v472 = vpop.f32.mrf.mxu0
      %v473 = vadd.f32 0.0, %v472
      %474 = vmatmul.f32.gmra.mxu0 %v347
      %v475 = vpop.f32.mrf.mxu0
      %v476 = vadd.f32 0.0, %v475
      %477 = vmatmul.f32.gmra.mxu0 %v350
      %v478 = vpop.f32.mrf.mxu0
      %v479 = vadd.f32 0.0, %v478
      %480 = vmatmul.f32.gmra.mxu0 %v353
      %v481 = vpop.f32.mrf.mxu0
      %v482 = vadd.f32 0.0, %v481
      %483 = vmatmul.f32.gmra.mxu0 %v356
      %v484 = vpop.f32.mrf.mxu0
      %v485 = vadd.f32 0.0, %v484
      %486 = vmatmul.f32.gmra.mxu0 %v359
      %v487 = vpop.f32.mrf.mxu0
      %v488 = vadd.f32 0.0, %v487
      %489 = vmatmul.f32.gmra.mxu0 %v362
      %v490 = vpop.f32.mrf.mxu0
      %v491 = vadd.f32 0.0, %v490
      %492 = vmatmul.f32.gmra.mxu0 %v365
      %v493 = vpop.f32.mrf.mxu0
      %v494 = vadd.f32 0.0, %v493
      %495 = vmatmul.f32.gmra.mxu0 %v368
      %v496 = vpop.f32.mrf.mxu0
      %v497 = vadd.f32 0.0, %v496
      %498 = vmatmul.f32.gmra.mxu0 %v371
      %v499 = vpop.f32.mrf.mxu0
      %v500 = vadd.f32 0.0, %v499
      %501 = vmatmul.f32.gmra.mxu0 %v374
      %v502 = vpop.f32.mrf.mxu0
      %v503 = vadd.f32 0.0, %v502
      %504 = vmatmul.f32.gmra.mxu0 %v377
      %v505 = vpop.f32.mrf.mxu0
      %v506 = vadd.f32 0.0, %v505
      %507 = vmatmul.f32.gmra.mxu0 %v380
      %v508 = vpop.f32.mrf.mxu0
      %v509 = vadd.f32 0.0, %v508
      %510 = vmatmul.f32.gmra.mxu0 %v383
      %v511 = vpop.f32.mrf.mxu0
      %v512 = vadd.f32 0.0, %v511
      %513 = vmatmul.f32.gmra.mxu0 %v386
      %v514 = vpop.f32.mrf.mxu0
      %v515 = vadd.f32 0.0, %v514
      %516 = vmatmul.f32.gmra.mxu0 %v389
      %v517 = vpop.f32.mrf.mxu0
      %v518 = vadd.f32 0.0, %v517
      %519 = vdwg.mxu0
      %v521 = vsel %vm282, %v207, 0
      %v524 = vsel %vm282, %v208, 0
      %v527 = vsel %vm282, %v209, 0
      %v530 = vsel %vm282, %v210, 0
      %v533 = vsel %vm282, %v211, 0
      %v536 = vsel %vm282, %v212, 0
      %v539 = vsel %vm282, %v213, 0
      %v542 = vsel %vm282, %v214, 0
      %v545 = vsel %vm282, %v215, 0
      %v548 = vsel %vm282, %v216, 0
      %v551 = vsel %vm282, %v217, 0
      %v554 = vsel %vm282, %v218, 0
      %v557 = vsel %vm282, %v219, 0
      %v560 = vsel %vm282, %v220, 0
      %v563 = vsel %vm282, %v221, 0
      %v566 = vsel %vm282, %v222, 0
      %v569 = vsel %vm282, %v223, 0
      %v572 = vsel %vm282, %v224, 0
      %v575 = vsel %vm282, %v225, 0
      %v578 = vsel %vm282, %v226, 0
      %v581 = vsel %vm282, %v227, 0
      %v584 = vsel %vm282, %v228, 0
      %v587 = vsel %vm282, %v229, 0
      %v590 = vsel %vm282, %v230, 0
      %v593 = vsel %vm282, %v231, 0
      %v596 = vsel %vm282, %v232, 0
      %v599 = vsel %vm282, %v233, 0
      %v602 = vsel %vm282, %v234, 0
      %v605 = vsel %vm282, %v235, 0
      %v608 = vsel %vm282, %v236, 0
      %v611 = vsel %vm282, %v237, 0
      %v614 = vsel %vm282, %v238, 0
      %v617 = vsel %vm282, %v239, 0
      %v620 = vsel %vm282, %v240, 0
      %v623 = vsel %vm282, %v241, 0
      %v626 = vsel %vm282, %v242, 0
      %v629 = vsel %vm391, %v243, 0
      %631 = vmatpush.msra.mxu0 0.0
      %632 = vmatpush.msra.mxu0 0.0
      %633 = vmatpush.msra.mxu0 0.0
      %634 = vmatpush.msra.mxu0 0.0
      %635 = vmatpush.msra.mxu0 0.0
      %636 = vmatpush.msra.mxu0 0.0
      %637 = vmatpush.msra.mxu0 0.0
      %638 = vmatpush.msra.mxu0 0.0
      %639 = vmatpush.msra.mxu0 0.0
      %640 = vmatpush.msra.mxu0 0.0
      %641 = vmatpush.msra.mxu0 0.0
      %642 = vmatpush.msra.mxu0 0.0
      %643 = vmatpush.msra.mxu0 0.0
      %644 = vmatpush.msra.mxu0 0.0
      %645 = vmatpush.msra.mxu0 0.0
      %646 = vmatpush.msra.mxu0 %v629
      %647 = vmatmul.f32.gmra.mxu0 %v521
      %v648 = vpop.f32.mrf.mxu0
      %v649 = vadd.f32 %v413, %v648
      %650 = vmatmul.f32.gmra.mxu0 %v524
      %v651 = vpop.f32.mrf.mxu0
      %v652 = vadd.f32 %v416, %v651
      %653 = vmatmul.f32.gmra.mxu0 %v527
      %v654 = vpop.f32.mrf.mxu0
      %v655 = vadd.f32 %v419, %v654
      %656 = vmatmul.f32.gmra.mxu0 %v530
      %v657 = vpop.f32.mrf.mxu0
      %v658 = vadd.f32 %v422, %v657
      %659 = vmatmul.f32.gmra.mxu0 %v533
      %v660 = vpop.f32.mrf.mxu0
      %v661 = vadd.f32 %v425, %v660
      %662 = vmatmul.f32.gmra.mxu0 %v536
      %v663 = vpop.f32.mrf.mxu0
      %v664 = vadd.f32 %v428, %v663
      %665 = vmatmul.f32.gmra.mxu0 %v539
      %v666 = vpop.f32.mrf.mxu0
      %v667 = vadd.f32 %v431, %v666
      %668 = vmatmul.f32.gmra.mxu0 %v542
      %v669 = vpop.f32.mrf.mxu0
      %v670 = vadd.f32 %v434, %v669
      %671 = vmatmul.f32.gmra.mxu0 %v545
      %v672 = vpop.f32.mrf.mxu0
      %v673 = vadd.f32 %v437, %v672
      %674 = vmatmul.f32.gmra.mxu0 %v548
      %v675 = vpop.f32.mrf.mxu0
      %v676 = vadd.f32 %v440, %v675
      %677 = vmatmul.f32.gmra.mxu0 %v551
      %v678 = vpop.f32.mrf.mxu0
      %v679 = vadd.f32 %v443, %v678
      %680 = vmatmul.f32.gmra.mxu0 %v554
      %v681 = vpop.f32.mrf.mxu0
      %v682 = vadd.f32 %v446, %v681
      %683 = vmatmul.f32.gmra.mxu0 %v557
      %v684 = vpop.f32.mrf.mxu0
      %v685 = vadd.f32 %v449, %v684
      %686 = vmatmul.f32.gmra.mxu0 %v560
      %v687 = vpop.f32.mrf.mxu0
      %v688 = vadd.f32 %v452, %v687
      %689 = vmatmul.f32.gmra.mxu0 %v563
      %v690 = vpop.f32.mrf.mxu0
      %v691 = vadd.f32 %v455, %v690
      %692 = vmatmul.f32.gmra.mxu0 %v566
      %v693 = vpop.f32.mrf.mxu0
      %v694 = vadd.f32 %v458, %v693
      %695 = vmatmul.f32.gmra.mxu0 %v569
      %v696 = vpop.f32.mrf.mxu0
      %v697 = vadd.f32 %v461, %v696
      %698 = vmatmul.f32.gmra.mxu0 %v572
      %v699 = vpop.f32.mrf.mxu0
      %v700 = vadd.f32 %v464, %v699
      %701 = vmatmul.f32.gmra.mxu0 %v575
      %v702 = vpop.f32.mrf.mxu0
      %v703 = vadd.f32 %v467, %v702
      %704 = vmatmul.f32.gmra.mxu0 %v578
      %v705 = vpop.f32.mrf.mxu0
      %v706 = vadd.f32 %v470, %v705
      %707 = vmatmul.f32.gmra.mxu0 %v581
      %v708 = vpop.f32.mrf.mxu0
      %v709 = vadd.f32 %v473, %v708
      %710 = vmatmul.f32.gmra.mxu0 %v584
      %v711 = vpop.f32.mrf.mxu0
      %v712 = vadd.f32 %v476, %v711
      %713 = vmatmul.f32.gmra.mxu0 %v587
      %v714 = vpop.f32.mrf.mxu0
      %v715 = vadd.f32 %v479, %v714
      %716 = vmatmul.f32.gmra.mxu0 %v590
      %v717 = vpop.f32.mrf.mxu0
      %v718 = vadd.f32 %v482, %v717
      %719 = vmatmul.f32.gmra.mxu0 %v593
      %v720 = vpop.f32.mrf.mxu0
      %v721 = vadd.f32 %v485, %v720
      %722 = vmatmul.f32.gmra.mxu0 %v596
      %v723 = vpop.f32.mrf.mxu0
      %v724 = vadd.f32 %v488, %v723
      %725 = vmatmul.f32.gmra.mxu0 %v599
      %v726 = vpop.f32.mrf.mxu0
      %v727 = vadd.f32 %v491, %v726
      %728 = vmatmul.f32.gmra.mxu0 %v602
      %v729 = vpop.f32.mrf.mxu0
      %v730 = vadd.f32 %v494, %v729
      %731 = vmatmul.f32.gmra.mxu0 %v605
      %v732 = vpop.f32.mrf.mxu0
      %v733 = vadd.f32 %v497, %v732
      %734 = vmatmul.f32.gmra.mxu0 %v608
      %v735 = vpop.f32.mrf.mxu0
      %v736 = vadd.f32 %v500, %v735
      %737 = vmatmul.f32.gmra.mxu0 %v611
      %v738 = vpop.f32.mrf.mxu0
      %v739 = vadd.f32 %v503, %v738
      %740 = vmatmul.f32.gmra.mxu0 %v614
      %v741 = vpop.f32.mrf.mxu0
      %v742 = vadd.f32 %v506, %v741
      %743 = vmatmul.f32.gmra.mxu0 %v617
      %v744 = vpop.f32.mrf.mxu0
      %v745 = vadd.f32 %v509, %v744
      %746 = vmatmul.f32.gmra.mxu0 %v620
      %v747 = vpop.f32.mrf.mxu0
      %v748 = vadd.f32 %v512, %v747
      %749 = vmatmul.f32.gmra.mxu0 %v623
      %v750 = vpop.f32.mrf.mxu0
      %v751 = vadd.f32 %v515, %v750
      %752 = vmatmul.f32.gmra.mxu0 %v626
      %v753 = vpop.f32.mrf.mxu0
      %v754 = vadd.f32 %v518, %v753
      %755 = vdwg.mxu0
      %v756 = vld [vmem:[%s197 + $0x2] sm:$0xff]
      %v757 = vld [vmem:[%s197 + $0xa] sm:$0xff]
      %v758 = vld [vmem:[%s197 + $0x12] sm:$0xff]
      %v759 = vld [vmem:[%s197 + $0x1a] sm:$0xff]
      %v760 = vld [vmem:[%s197 + $0x22] sm:$0xff]
      %v761 = vld [vmem:[%s197 + $0x2a] sm:$0xff]
      %v762 = vld [vmem:[%s197 + $0x32] sm:$0xff]
      %v763 = vld [vmem:[%s197 + $0x3a] sm:$0xff]
      %v764 = vld [vmem:[%s197 + $0x42] sm:$0xff]
      %v765 = vld [vmem:[%s197 + $0x4a] sm:$0xff]
      %v766 = vld [vmem:[%s197 + $0x52] sm:$0xff]
      %v767 = vld [vmem:[%s197 + $0x5a] sm:$0xff]
      %v768 = vld [vmem:[%s197 + $0x62] sm:$0xff]
      %v769 = vld [vmem:[%s197 + $0x6a] sm:$0xff]
      %v770 = vld [vmem:[%s197 + $0x72] sm:$0xff]
      %v771 = vld [vmem:[%s197 + $0x7a] sm:$0xff]
      %v772 = vld [vmem:[%s197 + $0x82] sm:$0xff]
      %v773 = vld [vmem:[%s197 + $0x8a] sm:$0xff]
      %v774 = vld [vmem:[%s197 + $0x92] sm:$0xff]
      %v775 = vld [vmem:[%s197 + $0x9a] sm:$0xff]
      %v776 = vld [vmem:[%s197 + $0xa2] sm:$0xff]
      %v777 = vld [vmem:[%s197 + $0xaa] sm:$0xff]
      %v778 = vld [vmem:[%s197 + $0xb2] sm:$0xff]
      %v779 = vld [vmem:[%s197 + $0xba] sm:$0xff]
      %v780 = vld [vmem:[%s197 + $0xc2] sm:$0xff]
      %v781 = vld [vmem:[%s197 + $0xca] sm:$0xff]
      %v782 = vld [vmem:[%s197 + $0xd2] sm:$0xff]
      %v783 = vld [vmem:[%s197 + $0xda] sm:$0xff]
      %v784 = vld [vmem:[%s197 + $0xe2] sm:$0xff]
      %v785 = vld [vmem:[%s197 + $0xea] sm:$0xff]
      %v786 = vld [vmem:[%s197 + $0xf2] sm:$0xff]
      %v787 = vld [vmem:[%s197 + $0xfa] sm:$0xff]
      %v788 = vld [vmem:[%s197 + $0x102] sm:$0xff]
      %v789 = vld [vmem:[%s197 + $0x10a] sm:$0xff]
      %v790 = vld [vmem:[%s197 + $0x112] sm:$0xff]
      %v791 = vld [vmem:[%s197 + $0x11a] sm:$0xff]
      %s792 = scalar_lea.vmem %s1, 8
      %v793 = vld [vmem:[%s792] sm:$0xf]
      %v795 = vsel %vm282, %v756, 0
      %v798 = vsel %vm282, %v757, 0
      %v801 = vsel %vm282, %v758, 0
      %v804 = vsel %vm282, %v759, 0
      %v807 = vsel %vm282, %v760, 0
      %v810 = vsel %vm282, %v761, 0
      %v813 = vsel %vm282, %v762, 0
      %v816 = vsel %vm282, %v763, 0
      %v819 = vsel %vm282, %v764, 0
      %v822 = vsel %vm282, %v765, 0
      %v825 = vsel %vm282, %v766, 0
      %v828 = vsel %vm282, %v767, 0
      %v831 = vsel %vm282, %v768, 0
      %v834 = vsel %vm282, %v769, 0
      %v837 = vsel %vm282, %v770, 0
      %v840 = vsel %vm282, %v771, 0
      %v843 = vsel %vm282, %v772, 0
      %v846 = vsel %vm282, %v773, 0
      %v849 = vsel %vm282, %v774, 0
      %v852 = vsel %vm282, %v775, 0
      %v855 = vsel %vm282, %v776, 0
      %v858 = vsel %vm282, %v777, 0
      %v861 = vsel %vm282, %v778, 0
      %v864 = vsel %vm282, %v779, 0
      %v867 = vsel %vm282, %v780, 0
      %v870 = vsel %vm282, %v781, 0
      %v873 = vsel %vm282, %v782, 0
      %v876 = vsel %vm282, %v783, 0
      %v879 = vsel %vm282, %v784, 0
      %v882 = vsel %vm282, %v785, 0
      %v885 = vsel %vm282, %v786, 0
      %v888 = vsel %vm282, %v787, 0
      %v891 = vsel %vm282, %v788, 0
      %v894 = vsel %vm282, %v789, 0
      %v897 = vsel %vm282, %v790, 0
      %v900 = vsel %vm282, %v791, 0
      %v903 = vsel %vm391, %v793, 0
      %905 = vmatpush.msra.mxu0 0.0
      %906 = vmatpush.msra.mxu0 0.0
      %907 = vmatpush.msra.mxu0 0.0
      %908 = vmatpush.msra.mxu0 0.0
      %909 = vmatpush.msra.mxu0 0.0
      %910 = vmatpush.msra.mxu0 0.0
      %911 = vmatpush.msra.mxu0 0.0
      %912 = vmatpush.msra.mxu0 0.0
      %913 = vmatpush.msra.mxu0 0.0
      %914 = vmatpush.msra.mxu0 0.0
      %915 = vmatpush.msra.mxu0 0.0
      %916 = vmatpush.msra.mxu0 0.0
      %917 = vmatpush.msra.mxu0 0.0
      %918 = vmatpush.msra.mxu0 0.0
      %919 = vmatpush.msra.mxu0 0.0
      %920 = vmatpush.msra.mxu0 %v903
      %921 = vmatmul.f32.gmra.mxu0 %v795
      %v922 = vpop.f32.mrf.mxu0
      %v923 = vadd.f32 0.0, %v922
      %924 = vmatmul.f32.gmra.mxu0 %v798
      %v925 = vpop.f32.mrf.mxu0
      %v926 = vadd.f32 0.0, %v925
      %927 = vmatmul.f32.gmra.mxu0 %v801
      %v928 = vpop.f32.mrf.mxu0
      %v929 = vadd.f32 0.0, %v928
      %930 = vmatmul.f32.gmra.mxu0 %v804
      %v931 = vpop.f32.mrf.mxu0
      %v932 = vadd.f32 0.0, %v931
      %933 = vmatmul.f32.gmra.mxu0 %v807
      %v934 = vpop.f32.mrf.mxu0
      %v935 = vadd.f32 0.0, %v934
      %936 = vmatmul.f32.gmra.mxu0 %v810
      %v937 = vpop.f32.mrf.mxu0
      %v938 = vadd.f32 0.0, %v937
      %939 = vmatmul.f32.gmra.mxu0 %v813
      %v940 = vpop.f32.mrf.mxu0
      %v941 = vadd.f32 0.0, %v940
      %942 = vmatmul.f32.gmra.mxu0 %v816
      %v943 = vpop.f32.mrf.mxu0
      %v944 = vadd.f32 0.0, %v943
      %945 = vmatmul.f32.gmra.mxu0 %v819
      %v946 = vpop.f32.mrf.mxu0
      %v947 = vadd.f32 0.0, %v946
      %948 = vmatmul.f32.gmra.mxu0 %v822
      %v949 = vpop.f32.mrf.mxu0
      %v950 = vadd.f32 0.0, %v949
      %951 = vmatmul.f32.gmra.mxu0 %v825
      %v952 = vpop.f32.mrf.mxu0
      %v953 = vadd.f32 0.0, %v952
      %954 = vmatmul.f32.gmra.mxu0 %v828
      %v955 = vpop.f32.mrf.mxu0
      %v956 = vadd.f32 0.0, %v955
      %957 = vmatmul.f32.gmra.mxu0 %v831
      %v958 = vpop.f32.mrf.mxu0
      %v959 = vadd.f32 0.0, %v958
      %960 = vmatmul.f32.gmra.mxu0 %v834
      %v961 = vpop.f32.mrf.mxu0
      %v962 = vadd.f32 0.0, %v961
      %963 = vmatmul.f32.gmra.mxu0 %v837
      %v964 = vpop.f32.mrf.mxu0
      %v965 = vadd.f32 0.0, %v964
      %966 = vmatmul.f32.gmra.mxu0 %v840
      %v967 = vpop.f32.mrf.mxu0
      %v968 = vadd.f32 0.0, %v967
      %969 = vmatmul.f32.gmra.mxu0 %v843
      %v970 = vpop.f32.mrf.mxu0
      %v971 = vadd.f32 0.0, %v970
      %972 = vmatmul.f32.gmra.mxu0 %v846
      %v973 = vpop.f32.mrf.mxu0
      %v974 = vadd.f32 0.0, %v973
      %975 = vmatmul.f32.gmra.mxu0 %v849
      %v976 = vpop.f32.mrf.mxu0
      %v977 = vadd.f32 0.0, %v976
      %978 = vmatmul.f32.gmra.mxu0 %v852
      %v979 = vpop.f32.mrf.mxu0
      %v980 = vadd.f32 0.0, %v979
      %981 = vmatmul.f32.gmra.mxu0 %v855
      %v982 = vpop.f32.mrf.mxu0
      %v983 = vadd.f32 0.0, %v982
      %984 = vmatmul.f32.gmra.mxu0 %v858
      %v985 = vpop.f32.mrf.mxu0
      %v986 = vadd.f32 0.0, %v985
      %987 = vmatmul.f32.gmra.mxu0 %v861
      %v988 = vpop.f32.mrf.mxu0
      %v989 = vadd.f32 0.0, %v988
      %990 = vmatmul.f32.gmra.mxu0 %v864
      %v991 = vpop.f32.mrf.mxu0
      %v992 = vadd.f32 0.0, %v991
      %993 = vmatmul.f32.gmra.mxu0 %v867
      %v994 = vpop.f32.mrf.mxu0
      %v995 = vadd.f32 0.0, %v994
      %996 = vmatmul.f32.gmra.mxu0 %v870
      %v997 = vpop.f32.mrf.mxu0
      %v998 = vadd.f32 0.0, %v997
      %999 = vmatmul.f32.gmra.mxu0 %v873
      %v1000 = vpop.f32.mrf.mxu0
      %v1001 = vadd.f32 0.0, %v1000
      %1002 = vmatmul.f32.gmra.mxu0 %v876
      %v1003 = vpop.f32.mrf.mxu0
      %v1004 = vadd.f32 0.0, %v1003
      %1005 = vmatmul.f32.gmra.mxu0 %v879
      %v1006 = vpop.f32.mrf.mxu0
      %v1007 = vadd.f32 0.0, %v1006
      %1008 = vmatmul.f32.gmra.mxu0 %v882
      %v1009 = vpop.f32.mrf.mxu0
      %v1010 = vadd.f32 0.0, %v1009
      %1011 = vmatmul.f32.gmra.mxu0 %v885
      %v1012 = vpop.f32.mrf.mxu0
      %v1013 = vadd.f32 0.0, %v1012
      %1014 = vmatmul.f32.gmra.mxu0 %v888
      %v1015 = vpop.f32.mrf.mxu0
      %v1016 = vadd.f32 0.0, %v1015
      %1017 = vmatmul.f32.gmra.mxu0 %v891
      %v1018 = vpop.f32.mrf.mxu0
      %v1019 = vadd.f32 0.0, %v1018
      %1020 = vmatmul.f32.gmra.mxu0 %v894
      %v1021 = vpop.f32.mrf.mxu0
      %v1022 = vadd.f32 0.0, %v1021
      %1023 = vmatmul.f32.gmra.mxu0 %v897
      %v1024 = vpop.f32.mrf.mxu0
      %v1025 = vadd.f32 0.0, %v1024
      %1026 = vmatmul.f32.gmra.mxu0 %v900
      %v1027 = vpop.f32.mrf.mxu0
      %v1028 = vadd.f32 0.0, %v1027
      %1029 = vdwg.mxu0
      %v1030 = vadd.f32 %v649, %v923
      %v1031 = vadd.f32 %v652, %v926
      %v1032 = vadd.f32 %v655, %v929
      %v1033 = vadd.f32 %v658, %v932
      %v1034 = vadd.f32 %v661, %v935
      %v1035 = vadd.f32 %v664, %v938
      %v1036 = vadd.f32 %v667, %v941
      %v1037 = vadd.f32 %v670, %v944
      %v1038 = vadd.f32 %v673, %v947
      %v1039 = vadd.f32 %v676, %v950
      %v1040 = vadd.f32 %v679, %v953
      %v1041 = vadd.f32 %v682, %v956
      %v1042 = vadd.f32 %v685, %v959
      %v1043 = vadd.f32 %v688, %v962
      %v1044 = vadd.f32 %v691, %v965
      %v1045 = vadd.f32 %v694, %v968
      %v1046 = vadd.f32 %v697, %v971
      %v1047 = vadd.f32 %v700, %v974
      %v1048 = vadd.f32 %v703, %v977
      %v1049 = vadd.f32 %v706, %v980
      %v1050 = vadd.f32 %v709, %v983
      %v1051 = vadd.f32 %v712, %v986
      %v1052 = vadd.f32 %v715, %v989
      %v1053 = vadd.f32 %v718, %v992
      %v1054 = vadd.f32 %v721, %v995
      %v1055 = vadd.f32 %v724, %v998
      %v1056 = vadd.f32 %v727, %v1001
      %v1057 = vadd.f32 %v730, %v1004
      %v1058 = vadd.f32 %v733, %v1007
      %v1059 = vadd.f32 %v736, %v1010
      %v1060 = vadd.f32 %v739, %v1013
      %v1061 = vadd.f32 %v742, %v1016
      %v1062 = vadd.f32 %v745, %v1019
      %v1063 = vadd.f32 %v748, %v1022
      %v1064 = vadd.f32 %v751, %v1025
      %v1065 = vadd.f32 %v754, %v1028
      %v1066 = vld [vmem:[%s197 + $0x12] sm:$0xff]
      %v1067 = vld [vmem:[%s197 + $0x1a] sm:$0xff]
      %v1068 = vld [vmem:[%s197 + $0x22] sm:$0xff]
      %v1069 = vld [vmem:[%s197 + $0x2a] sm:$0xff]
      %v1070 = vld [vmem:[%s197 + $0x32] sm:$0xff]
      %v1071 = vld [vmem:[%s197 + $0x3a] sm:$0xff]
      %v1072 = vld [vmem:[%s197 + $0x42] sm:$0xff]
      %v1073 = vld [vmem:[%s197 + $0x4a] sm:$0xff]
      %v1074 = vld [vmem:[%s197 + $0x52] sm:$0xff]
      %v1075 = vld [vmem:[%s197 + $0x5a] sm:$0xff]
      %v1076 = vld [vmem:[%s197 + $0x62] sm:$0xff]
      %v1077 = vld [vmem:[%s197 + $0x6a] sm:$0xff]
      %v1078 = vld [vmem:[%s197 + $0x72] sm:$0xff]
      %v1079 = vld [vmem:[%s197 + $0x7a] sm:$0xff]
      %v1080 = vld [vmem:[%s197 + $0x82] sm:$0xff]
      %v1081 = vld [vmem:[%s197 + $0x8a] sm:$0xff]
      %v1082 = vld [vmem:[%s197 + $0x92] sm:$0xff]
      %v1083 = vld [vmem:[%s197 + $0x9a] sm:$0xff]
      %v1084 = vld [vmem:[%s197 + $0xa2] sm:$0xff]
      %v1085 = vld [vmem:[%s197 + $0xaa] sm:$0xff]
      %v1086 = vld [vmem:[%s197 + $0xb2] sm:$0xff]
      %v1087 = vld [vmem:[%s197 + $0xba] sm:$0xff]
      %v1088 = vld [vmem:[%s197 + $0xc2] sm:$0xff]
      %v1089 = vld [vmem:[%s197 + $0xca] sm:$0xff]
      %v1090 = vld [vmem:[%s197 + $0xd2] sm:$0xff]
      %v1091 = vld [vmem:[%s197 + $0xda] sm:$0xff]
      %v1092 = vld [vmem:[%s197 + $0xe2] sm:$0xff]
      %v1093 = vld [vmem:[%s197 + $0xea] sm:$0xff]
      %v1094 = vld [vmem:[%s197 + $0xf2] sm:$0xff]
      %v1095 = vld [vmem:[%s197 + $0xfa] sm:$0xff]
      %v1096 = vld [vmem:[%s197 + $0x102] sm:$0xff]
      %v1097 = vld [vmem:[%s197 + $0x10a] sm:$0xff]
      %v1098 = vld [vmem:[%s197 + $0x112] sm:$0xff]
      %v1099 = vld [vmem:[%s197 + $0x11a] sm:$0xff]
      %v1100 = vld [vmem:[%s197 + $0x122] sm:$0xff]
      %v1101 = vld [vmem:[%s197 + $0x12a] sm:$0xff]
      %s1102 = scalar_lea.vmem %s1, 12
      %v1103 = vld [vmem:[%s1102] sm:$0xf]
      %v1105 = vsel %vm282, %v1066, 0
      %v1108 = vsel %vm282, %v1067, 0
      %v1111 = vsel %vm282, %v1068, 0
      %v1114 = vsel %vm282, %v1069, 0
      %v1117 = vsel %vm282, %v1070, 0
      %v1120 = vsel %vm282, %v1071, 0
      %v1123 = vsel %vm282, %v1072, 0
      %v1126 = vsel %vm282, %v1073, 0
      %v1129 = vsel %vm282, %v1074, 0
      %v1132 = vsel %vm282, %v1075, 0
      %v1135 = vsel %vm282, %v1076, 0
      %v1138 = vsel %vm282, %v1077, 0
      %v1141 = vsel %vm282, %v1078, 0
      %v1144 = vsel %vm282, %v1079, 0
      %v1147 = vsel %vm282, %v1080, 0
      %v1150 = vsel %vm282, %v1081, 0
      %v1153 = vsel %vm282, %v1082, 0
      %v1156 = vsel %vm282, %v1083, 0
      %v1159 = vsel %vm282, %v1084, 0
      %v1162 = vsel %vm282, %v1085, 0
      %v1165 = vsel %vm282, %v1086, 0
      %v1168 = vsel %vm282, %v1087, 0
      %v1171 = vsel %vm282, %v1088, 0
      %v1174 = vsel %vm282, %v1089, 0
      %v1177 = vsel %vm282, %v1090, 0
      %v1180 = vsel %vm282, %v1091, 0
      %v1183 = vsel %vm282, %v1092, 0
      %v1186 = vsel %vm282, %v1093, 0
      %v1189 = vsel %vm282, %v1094, 0
      %v1192 = vsel %vm282, %v1095, 0
      %v1195 = vsel %vm282, %v1096, 0
      %v1198 = vsel %vm282, %v1097, 0
      %v1201 = vsel %vm282, %v1098, 0
      %v1204 = vsel %vm282, %v1099, 0
      %v1207 = vsel %vm282, %v1100, 0
      %v1210 = vsel %vm282, %v1101, 0
      %v1213 = vsel %vm391, %v1103, 0
      %1215 = vmatpush.msra.mxu0 0.0
      %1216 = vmatpush.msra.mxu0 0.0
      %1217 = vmatpush.msra.mxu0 0.0
      %1218 = vmatpush.msra.mxu0 0.0
      %1219 = vmatpush.msra.mxu0 0.0
      %1220 = vmatpush.msra.mxu0 0.0
      %1221 = vmatpush.msra.mxu0 0.0
      %1222 = vmatpush.msra.mxu0 0.0
      %1223 = vmatpush.msra.mxu0 0.0
      %1224 = vmatpush.msra.mxu0 0.0
      %1225 = vmatpush.msra.mxu0 0.0
      %1226 = vmatpush.msra.mxu0 0.0
      %1227 = vmatpush.msra.mxu0 0.0
      %1228 = vmatpush.msra.mxu0 0.0
      %1229 = vmatpush.msra.mxu0 0.0
      %1230 = vmatpush.msra.mxu0 %v1213
      %1231 = vmatmul.f32.gmra.mxu0 %v1105
      %v1232 = vpop.f32.mrf.mxu0
      %v1233 = vadd.f32 0.0, %v1232
      %1234 = vmatmul.f32.gmra.mxu0 %v1108
      %v1235 = vpop.f32.mrf.mxu0
      %v1236 = vadd.f32 0.0, %v1235
      %1237 = vmatmul.f32.gmra.mxu0 %v1111
      %v1238 = vpop.f32.mrf.mxu0
      %v1239 = vadd.f32 0.0, %v1238
      %1240 = vmatmul.f32.gmra.mxu0 %v1114
      %v1241 = vpop.f32.mrf.mxu0
      %v1242 = vadd.f32 0.0, %v1241
      %1243 = vmatmul.f32.gmra.mxu0 %v1117
      %v1244 = vpop.f32.mrf.mxu0
      %v1245 = vadd.f32 0.0, %v1244
      %1246 = vmatmul.f32.gmra.mxu0 %v1120
      %v1247 = vpop.f32.mrf.mxu0
      %v1248 = vadd.f32 0.0, %v1247
      %1249 = vmatmul.f32.gmra.mxu0 %v1123
      %v1250 = vpop.f32.mrf.mxu0
      %v1251 = vadd.f32 0.0, %v1250
      %1252 = vmatmul.f32.gmra.mxu0 %v1126
      %v1253 = vpop.f32.mrf.mxu0
      %v1254 = vadd.f32 0.0, %v1253
      %1255 = vmatmul.f32.gmra.mxu0 %v1129
      %v1256 = vpop.f32.mrf.mxu0
      %v1257 = vadd.f32 0.0, %v1256
      %1258 = vmatmul.f32.gmra.mxu0 %v1132
      %v1259 = vpop.f32.mrf.mxu0
      %v1260 = vadd.f32 0.0, %v1259
      %1261 = vmatmul.f32.gmra.mxu0 %v1135
      %v1262 = vpop.f32.mrf.mxu0
      %v1263 = vadd.f32 0.0, %v1262
      %1264 = vmatmul.f32.gmra.mxu0 %v1138
      %v1265 = vpop.f32.mrf.mxu0
      %v1266 = vadd.f32 0.0, %v1265
      %1267 = vmatmul.f32.gmra.mxu0 %v1141
      %v1268 = vpop.f32.mrf.mxu0
      %v1269 = vadd.f32 0.0, %v1268
      %1270 = vmatmul.f32.gmra.mxu0 %v1144
      %v1271 = vpop.f32.mrf.mxu0
      %v1272 = vadd.f32 0.0, %v1271
      %1273 = vmatmul.f32.gmra.mxu0 %v1147
      %v1274 = vpop.f32.mrf.mxu0
      %v1275 = vadd.f32 0.0, %v1274
      %1276 = vmatmul.f32.gmra.mxu0 %v1150
      %v1277 = vpop.f32.mrf.mxu0
      %v1278 = vadd.f32 0.0, %v1277
      %1279 = vmatmul.f32.gmra.mxu0 %v1153
      %v1280 = vpop.f32.mrf.mxu0
      %v1281 = vadd.f32 0.0, %v1280
      %1282 = vmatmul.f32.gmra.mxu0 %v1156
      %v1283 = vpop.f32.mrf.mxu0
      %v1284 = vadd.f32 0.0, %v1283
      %1285 = vmatmul.f32.gmra.mxu0 %v1159
      %v1286 = vpop.f32.mrf.mxu0
      %v1287 = vadd.f32 0.0, %v1286
      %1288 = vmatmul.f32.gmra.mxu0 %v1162
      %v1289 = vpop.f32.mrf.mxu0
      %v1290 = vadd.f32 0.0, %v1289
      %1291 = vmatmul.f32.gmra.mxu0 %v1165
      %v1292 = vpop.f32.mrf.mxu0
      %v1293 = vadd.f32 0.0, %v1292
      %1294 = vmatmul.f32.gmra.mxu0 %v1168
      %v1295 = vpop.f32.mrf.mxu0
      %v1296 = vadd.f32 0.0, %v1295
      %1297 = vmatmul.f32.gmra.mxu0 %v1171
      %v1298 = vpop.f32.mrf.mxu0
      %v1299 = vadd.f32 0.0, %v1298
      %1300 = vmatmul.f32.gmra.mxu0 %v1174
      %v1301 = vpop.f32.mrf.mxu0
      %v1302 = vadd.f32 0.0, %v1301
      %1303 = vmatmul.f32.gmra.mxu0 %v1177
      %v1304 = vpop.f32.mrf.mxu0
      %v1305 = vadd.f32 0.0, %v1304
      %1306 = vmatmul.f32.gmra.mxu0 %v1180
      %v1307 = vpop.f32.mrf.mxu0
      %v1308 = vadd.f32 0.0, %v1307
      %1309 = vmatmul.f32.gmra.mxu0 %v1183
      %v1310 = vpop.f32.mrf.mxu0
      %v1311 = vadd.f32 0.0, %v1310
      %1312 = vmatmul.f32.gmra.mxu0 %v1186
      %v1313 = vpop.f32.mrf.mxu0
      %v1314 = vadd.f32 0.0, %v1313
      %1315 = vmatmul.f32.gmra.mxu0 %v1189
      %v1316 = vpop.f32.mrf.mxu0
      %v1317 = vadd.f32 0.0, %v1316
      %1318 = vmatmul.f32.gmra.mxu0 %v1192
      %v1319 = vpop.f32.mrf.mxu0
      %v1320 = vadd.f32 0.0, %v1319
      %1321 = vmatmul.f32.gmra.mxu0 %v1195
      %v1322 = vpop.f32.mrf.mxu0
      %v1323 = vadd.f32 0.0, %v1322
      %1324 = vmatmul.f32.gmra.mxu0 %v1198
      %v1325 = vpop.f32.mrf.mxu0
      %v1326 = vadd.f32 0.0, %v1325
      %1327 = vmatmul.f32.gmra.mxu0 %v1201
      %v1328 = vpop.f32.mrf.mxu0
      %v1329 = vadd.f32 0.0, %v1328
      %1330 = vmatmul.f32.gmra.mxu0 %v1204
      %v1331 = vpop.f32.mrf.mxu0
      %v1332 = vadd.f32 0.0, %v1331
      %1333 = vmatmul.f32.gmra.mxu0 %v1207
      %v1334 = vpop.f32.mrf.mxu0
      %v1335 = vadd.f32 0.0, %v1334
      %1336 = vmatmul.f32.gmra.mxu0 %v1210
      %v1337 = vpop.f32.mrf.mxu0
      %v1338 = vadd.f32 0.0, %v1337
      %1339 = vdwg.mxu0
      %v1340 = vadd.f32 %v1030, %v1233
      %v1341 = vadd.f32 %v1031, %v1236
      %v1342 = vadd.f32 %v1032, %v1239
      %v1343 = vadd.f32 %v1033, %v1242
      %v1344 = vadd.f32 %v1034, %v1245
      %v1345 = vadd.f32 %v1035, %v1248
      %v1346 = vadd.f32 %v1036, %v1251
      %v1347 = vadd.f32 %v1037, %v1254
      %v1348 = vadd.f32 %v1038, %v1257
      %v1349 = vadd.f32 %v1039, %v1260
      %v1350 = vadd.f32 %v1040, %v1263
      %v1351 = vadd.f32 %v1041, %v1266
      %v1352 = vadd.f32 %v1042, %v1269
      %v1353 = vadd.f32 %v1043, %v1272
      %v1354 = vadd.f32 %v1044, %v1275
      %v1355 = vadd.f32 %v1045, %v1278
      %v1356 = vadd.f32 %v1046, %v1281
      %v1357 = vadd.f32 %v1047, %v1284
      %v1358 = vadd.f32 %v1048, %v1287
      %v1359 = vadd.f32 %v1049, %v1290
      %v1360 = vadd.f32 %v1050, %v1293
      %v1361 = vadd.f32 %v1051, %v1296
      %v1362 = vadd.f32 %v1052, %v1299
      %v1363 = vadd.f32 %v1053, %v1302
      %v1364 = vadd.f32 %v1054, %v1305
      %v1365 = vadd.f32 %v1055, %v1308
      %v1366 = vadd.f32 %v1056, %v1311
      %v1367 = vadd.f32 %v1057, %v1314
      %v1368 = vadd.f32 %v1058, %v1317
      %v1369 = vadd.f32 %v1059, %v1320
      %v1370 = vadd.f32 %v1060, %v1323
      %v1371 = vadd.f32 %v1061, %v1326
      %v1372 = vadd.f32 %v1062, %v1329
      %v1373 = vadd.f32 %v1063, %v1332
      %v1374 = vadd.f32 %v1064, %v1335
      %v1375 = vadd.f32 %v1065, %v1338
      %v1376 = vld [vmem:[%s197 + $0x13] sm:$0xff]
      %v1377 = vld [vmem:[%s197 + $0x1b] sm:$0xff]
      %v1378 = vld [vmem:[%s197 + $0x23] sm:$0xff]
      %v1379 = vld [vmem:[%s197 + $0x2b] sm:$0xff]
      %v1380 = vld [vmem:[%s197 + $0x33] sm:$0xff]
      %v1381 = vld [vmem:[%s197 + $0x3b] sm:$0xff]
      %v1382 = vld [vmem:[%s197 + $0x43] sm:$0xff]
      %v1383 = vld [vmem:[%s197 + $0x4b] sm:$0xff]
      %v1384 = vld [vmem:[%s197 + $0x53] sm:$0xff]
      %v1385 = vld [vmem:[%s197 + $0x5b] sm:$0xff]
      %v1386 = vld [vmem:[%s197 + $0x63] sm:$0xff]
      %v1387 = vld [vmem:[%s197 + $0x6b] sm:$0xff]
      %v1388 = vld [vmem:[%s197 + $0x73] sm:$0xff]
      %v1389 = vld [vmem:[%s197 + $0x7b] sm:$0xff]
      %v1390 = vld [vmem:[%s197 + $0x83] sm:$0xff]
      %v1391 = vld [vmem:[%s197 + $0x8b] sm:$0xff]
      %v1392 = vld [vmem:[%s197 + $0x93] sm:$0xff]
      %v1393 = vld [vmem:[%s197 + $0x9b] sm:$0xff]
      %v1394 = vld [vmem:[%s197 + $0xa3] sm:$0xff]
      %v1395 = vld [vmem:[%s197 + $0xab] sm:$0xff]
      %v1396 = vld [vmem:[%s197 + $0xb3] sm:$0xff]
      %v1397 = vld [vmem:[%s197 + $0xbb] sm:$0xff]
      %v1398 = vld [vmem:[%s197 + $0xc3] sm:$0xff]
      %v1399 = vld [vmem:[%s197 + $0xcb] sm:$0xff]
      %v1400 = vld [vmem:[%s197 + $0xd3] sm:$0xff]
      %v1401 = vld [vmem:[%s197 + $0xdb] sm:$0xff]
      %v1402 = vld [vmem:[%s197 + $0xe3] sm:$0xff]
      %v1403 = vld [vmem:[%s197 + $0xeb] sm:$0xff]
      %v1404 = vld [vmem:[%s197 + $0xf3] sm:$0xff]
      %v1405 = vld [vmem:[%s197 + $0xfb] sm:$0xff]
      %v1406 = vld [vmem:[%s197 + $0x103] sm:$0xff]
      %v1407 = vld [vmem:[%s197 + $0x10b] sm:$0xff]
      %v1408 = vld [vmem:[%s197 + $0x113] sm:$0xff]
      %v1409 = vld [vmem:[%s197 + $0x11b] sm:$0xff]
      %v1410 = vld [vmem:[%s197 + $0x123] sm:$0xff]
      %v1411 = vld [vmem:[%s197 + $0x12b] sm:$0xff]
      %s1412 = scalar_lea.vmem %s1, 16
      %v1413 = vld [vmem:[%s1412] sm:$0xf]
      %v1415 = vsel %vm282, %v1376, 0
      %v1418 = vsel %vm282, %v1377, 0
      %v1421 = vsel %vm282, %v1378, 0
      %v1424 = vsel %vm282, %v1379, 0
      %v1427 = vsel %vm282, %v1380, 0
      %v1430 = vsel %vm282, %v1381, 0
      %v1433 = vsel %vm282, %v1382, 0
      %v1436 = vsel %vm282, %v1383, 0
      %v1439 = vsel %vm282, %v1384, 0
      %v1442 = vsel %vm282, %v1385, 0
      %v1445 = vsel %vm282, %v1386, 0
      %v1448 = vsel %vm282, %v1387, 0
      %v1451 = vsel %vm282, %v1388, 0
      %v1454 = vsel %vm282, %v1389, 0
      %v1457 = vsel %vm282, %v1390, 0
      %v1460 = vsel %vm282, %v1391, 0
      %v1463 = vsel %vm282, %v1392, 0
      %v1466 = vsel %vm282, %v1393, 0
      %v1469 = vsel %vm282, %v1394, 0
      %v1472 = vsel %vm282, %v1395, 0
      %v1475 = vsel %vm282, %v1396, 0
      %v1478 = vsel %vm282, %v1397, 0
      %v1481 = vsel %vm282, %v1398, 0
      %v1484 = vsel %vm282, %v1399, 0
      %v1487 = vsel %vm282, %v1400, 0
      %v1490 = vsel %vm282, %v1401, 0
      %v1493 = vsel %vm282, %v1402, 0
      %v1496 = vsel %vm282, %v1403, 0
      %v1499 = vsel %vm282, %v1404, 0
      %v1502 = vsel %vm282, %v1405, 0
      %v1505 = vsel %vm282, %v1406, 0
      %v1508 = vsel %vm282, %v1407, 0
      %v1511 = vsel %vm282, %v1408, 0
      %v1514 = vsel %vm282, %v1409, 0
      %v1517 = vsel %vm282, %v1410, 0
      %v1520 = vsel %vm282, %v1411, 0
      %v1523 = vsel %vm391, %v1413, 0
      %1525 = vmatpush.msra.mxu0 0.0
      %1526 = vmatpush.msra.mxu0 0.0
      %1527 = vmatpush.msra.mxu0 0.0
      %1528 = vmatpush.msra.mxu0 0.0
      %1529 = vmatpush.msra.mxu0 0.0
      %1530 = vmatpush.msra.mxu0 0.0
      %1531 = vmatpush.msra.mxu0 0.0
      %1532 = vmatpush.msra.mxu0 0.0
      %1533 = vmatpush.msra.mxu0 0.0
      %1534 = vmatpush.msra.mxu0 0.0
      %1535 = vmatpush.msra.mxu0 0.0
      %1536 = vmatpush.msra.mxu0 0.0
      %1537 = vmatpush.msra.mxu0 0.0
      %1538 = vmatpush.msra.mxu0 0.0
      %1539 = vmatpush.msra.mxu0 0.0
      %1540 = vmatpush.msra.mxu0 %v1523
      %1541 = vmatmul.f32.gmra.mxu0 %v1415
      %v1542 = vpop.f32.mrf.mxu0
      %v1543 = vadd.f32 0.0, %v1542
      %1544 = vmatmul.f32.gmra.mxu0 %v1418
      %v1545 = vpop.f32.mrf.mxu0
      %v1546 = vadd.f32 0.0, %v1545
      %1547 = vmatmul.f32.gmra.mxu0 %v1421
      %v1548 = vpop.f32.mrf.mxu0
      %v1549 = vadd.f32 0.0, %v1548
      %1550 = vmatmul.f32.gmra.mxu0 %v1424
      %v1551 = vpop.f32.mrf.mxu0
      %v1552 = vadd.f32 0.0, %v1551
      %1553 = vmatmul.f32.gmra.mxu0 %v1427
      %v1554 = vpop.f32.mrf.mxu0
      %v1555 = vadd.f32 0.0, %v1554
      %1556 = vmatmul.f32.gmra.mxu0 %v1430
      %v1557 = vpop.f32.mrf.mxu0
      %v1558 = vadd.f32 0.0, %v1557
      %1559 = vmatmul.f32.gmra.mxu0 %v1433
      %v1560 = vpop.f32.mrf.mxu0
      %v1561 = vadd.f32 0.0, %v1560
      %1562 = vmatmul.f32.gmra.mxu0 %v1436
      %v1563 = vpop.f32.mrf.mxu0
      %v1564 = vadd.f32 0.0, %v1563
      %1565 = vmatmul.f32.gmra.mxu0 %v1439
      %v1566 = vpop.f32.mrf.mxu0
      %v1567 = vadd.f32 0.0, %v1566
      %1568 = vmatmul.f32.gmra.mxu0 %v1442
      %v1569 = vpop.f32.mrf.mxu0
      %v1570 = vadd.f32 0.0, %v1569
      %1571 = vmatmul.f32.gmra.mxu0 %v1445
      %v1572 = vpop.f32.mrf.mxu0
      %v1573 = vadd.f32 0.0, %v1572
      %1574 = vmatmul.f32.gmra.mxu0 %v1448
      %v1575 = vpop.f32.mrf.mxu0
      %v1576 = vadd.f32 0.0, %v1575
      %1577 = vmatmul.f32.gmra.mxu0 %v1451
      %v1578 = vpop.f32.mrf.mxu0
      %v1579 = vadd.f32 0.0, %v1578
      %1580 = vmatmul.f32.gmra.mxu0 %v1454
      %v1581 = vpop.f32.mrf.mxu0
      %v1582 = vadd.f32 0.0, %v1581
      %1583 = vmatmul.f32.gmra.mxu0 %v1457
      %v1584 = vpop.f32.mrf.mxu0
      %v1585 = vadd.f32 0.0, %v1584
      %1586 = vmatmul.f32.gmra.mxu0 %v1460
      %v1587 = vpop.f32.mrf.mxu0
      %v1588 = vadd.f32 0.0, %v1587
      %1589 = vmatmul.f32.gmra.mxu0 %v1463
      %v1590 = vpop.f32.mrf.mxu0
      %v1591 = vadd.f32 0.0, %v1590
      %1592 = vmatmul.f32.gmra.mxu0 %v1466
      %v1593 = vpop.f32.mrf.mxu0
      %v1594 = vadd.f32 0.0, %v1593
      %1595 = vmatmul.f32.gmra.mxu0 %v1469
      %v1596 = vpop.f32.mrf.mxu0
      %v1597 = vadd.f32 0.0, %v1596
      %1598 = vmatmul.f32.gmra.mxu0 %v1472
      %v1599 = vpop.f32.mrf.mxu0
      %v1600 = vadd.f32 0.0, %v1599
      %1601 = vmatmul.f32.gmra.mxu0 %v1475
      %v1602 = vpop.f32.mrf.mxu0
      %v1603 = vadd.f32 0.0, %v1602
      %1604 = vmatmul.f32.gmra.mxu0 %v1478
      %v1605 = vpop.f32.mrf.mxu0
      %v1606 = vadd.f32 0.0, %v1605
      %1607 = vmatmul.f32.gmra.mxu0 %v1481
      %v1608 = vpop.f32.mrf.mxu0
      %v1609 = vadd.f32 0.0, %v1608
      %1610 = vmatmul.f32.gmra.mxu0 %v1484
      %v1611 = vpop.f32.mrf.mxu0
      %v1612 = vadd.f32 0.0, %v1611
      %1613 = vmatmul.f32.gmra.mxu0 %v1487
      %v1614 = vpop.f32.mrf.mxu0
      %v1615 = vadd.f32 0.0, %v1614
      %1616 = vmatmul.f32.gmra.mxu0 %v1490
      %v1617 = vpop.f32.mrf.mxu0
      %v1618 = vadd.f32 0.0, %v1617
      %1619 = vmatmul.f32.gmra.mxu0 %v1493
      %v1620 = vpop.f32.mrf.mxu0
      %v1621 = vadd.f32 0.0, %v1620
      %1622 = vmatmul.f32.gmra.mxu0 %v1496
      %v1623 = vpop.f32.mrf.mxu0
      %v1624 = vadd.f32 0.0, %v1623
      %1625 = vmatmul.f32.gmra.mxu0 %v1499
      %v1626 = vpop.f32.mrf.mxu0
      %v1627 = vadd.f32 0.0, %v1626
      %1628 = vmatmul.f32.gmra.mxu0 %v1502
      %v1629 = vpop.f32.mrf.mxu0
      %v1630 = vadd.f32 0.0, %v1629
      %1631 = vmatmul.f32.gmra.mxu0 %v1505
      %v1632 = vpop.f32.mrf.mxu0
      %v1633 = vadd.f32 0.0, %v1632
      %1634 = vmatmul.f32.gmra.mxu0 %v1508
      %v1635 = vpop.f32.mrf.mxu0
      %v1636 = vadd.f32 0.0, %v1635
      %1637 = vmatmul.f32.gmra.mxu0 %v1511
      %v1638 = vpop.f32.mrf.mxu0
      %v1639 = vadd.f32 0.0, %v1638
      %1640 = vmatmul.f32.gmra.mxu0 %v1514
      %v1641 = vpop.f32.mrf.mxu0
      %v1642 = vadd.f32 0.0, %v1641
      %1643 = vmatmul.f32.gmra.mxu0 %v1517
      %v1644 = vpop.f32.mrf.mxu0
      %v1645 = vadd.f32 0.0, %v1644
      %1646 = vmatmul.f32.gmra.mxu0 %v1520
      %v1647 = vpop.f32.mrf.mxu0
      %v1648 = vadd.f32 0.0, %v1647
      %1649 = vdwg.mxu0
      %v1650 = vadd.f32 %v1340, %v1543
      %v1651 = vadd.f32 %v1341, %v1546
      %v1652 = vadd.f32 %v1342, %v1549
      %v1653 = vadd.f32 %v1343, %v1552
      %v1654 = vadd.f32 %v1344, %v1555
      %v1655 = vadd.f32 %v1345, %v1558
      %v1656 = vadd.f32 %v1346, %v1561
      %v1657 = vadd.f32 %v1347, %v1564
      %v1658 = vadd.f32 %v1348, %v1567
      %v1659 = vadd.f32 %v1349, %v1570
      %v1660 = vadd.f32 %v1350, %v1573
      %v1661 = vadd.f32 %v1351, %v1576
      %v1662 = vadd.f32 %v1352, %v1579
      %v1663 = vadd.f32 %v1353, %v1582
      %v1664 = vadd.f32 %v1354, %v1585
      %v1665 = vadd.f32 %v1355, %v1588
      %v1666 = vadd.f32 %v1356, %v1591
      %v1667 = vadd.f32 %v1357, %v1594
      %v1668 = vadd.f32 %v1358, %v1597
      %v1669 = vadd.f32 %v1359, %v1600
      %v1670 = vadd.f32 %v1360, %v1603
      %v1671 = vadd.f32 %v1361, %v1606
      %v1672 = vadd.f32 %v1362, %v1609
      %v1673 = vadd.f32 %v1363, %v1612
      %v1674 = vadd.f32 %v1364, %v1615
      %v1675 = vadd.f32 %v1365, %v1618
      %v1676 = vadd.f32 %v1366, %v1621
      %v1677 = vadd.f32 %v1367, %v1624
      %v1678 = vadd.f32 %v1368, %v1627
      %v1679 = vadd.f32 %v1369, %v1630
      %v1680 = vadd.f32 %v1370, %v1633
      %v1681 = vadd.f32 %v1371, %v1636
      %v1682 = vadd.f32 %v1372, %v1639
      %v1683 = vadd.f32 %v1373, %v1642
      %v1684 = vadd.f32 %v1374, %v1645
      %v1685 = vadd.f32 %v1375, %v1648
      %v1686 = vld [vmem:[%s197 + $0x14] sm:$0xff]
      %v1687 = vld [vmem:[%s197 + $0x1c] sm:$0xff]
      %v1688 = vld [vmem:[%s197 + $0x24] sm:$0xff]
      %v1689 = vld [vmem:[%s197 + $0x2c] sm:$0xff]
      %v1690 = vld [vmem:[%s197 + $0x34] sm:$0xff]
      %v1691 = vld [vmem:[%s197 + $0x3c] sm:$0xff]
      %v1692 = vld [vmem:[%s197 + $0x44] sm:$0xff]
      %v1693 = vld [vmem:[%s197 + $0x4c] sm:$0xff]
      %v1694 = vld [vmem:[%s197 + $0x54] sm:$0xff]
      %v1695 = vld [vmem:[%s197 + $0x5c] sm:$0xff]
      %v1696 = vld [vmem:[%s197 + $0x64] sm:$0xff]
      %v1697 = vld [vmem:[%s197 + $0x6c] sm:$0xff]
      %v1698 = vld [vmem:[%s197 + $0x74] sm:$0xff]
      %v1699 = vld [vmem:[%s197 + $0x7c] sm:$0xff]
      %v1700 = vld [vmem:[%s197 + $0x84] sm:$0xff]
      %v1701 = vld [vmem:[%s197 + $0x8c] sm:$0xff]
      %v1702 = vld [vmem:[%s197 + $0x94] sm:$0xff]
      %v1703 = vld [vmem:[%s197 + $0x9c] sm:$0xff]
      %v1704 = vld [vmem:[%s197 + $0xa4] sm:$0xff]
      %v1705 = vld [vmem:[%s197 + $0xac] sm:$0xff]
      %v1706 = vld [vmem:[%s197 + $0xb4] sm:$0xff]
      %v1707 = vld [vmem:[%s197 + $0xbc] sm:$0xff]
      %v1708 = vld [vmem:[%s197 + $0xc4] sm:$0xff]
      %v1709 = vld [vmem:[%s197 + $0xcc] sm:$0xff]
      %v1710 = vld [vmem:[%s197 + $0xd4] sm:$0xff]
      %v1711 = vld [vmem:[%s197 + $0xdc] sm:$0xff]
      %v1712 = vld [vmem:[%s197 + $0xe4] sm:$0xff]
      %v1713 = vld [vmem:[%s197 + $0xec] sm:$0xff]
      %v1714 = vld [vmem:[%s197 + $0xf4] sm:$0xff]
      %v1715 = vld [vmem:[%s197 + $0xfc] sm:$0xff]
      %v1716 = vld [vmem:[%s197 + $0x104] sm:$0xff]
      %v1717 = vld [vmem:[%s197 + $0x10c] sm:$0xff]
      %v1718 = vld [vmem:[%s197 + $0x114] sm:$0xff]
      %v1719 = vld [vmem:[%s197 + $0x11c] sm:$0xff]
      %v1720 = vld [vmem:[%s197 + $0x124] sm:$0xff]
      %v1721 = vld [vmem:[%s197 + $0x12c] sm:$0xff]
      %s1722 = scalar_lea.vmem %s1, 20
      %v1723 = vld [vmem:[%s1722] sm:$0xf]
      %v1725 = vsel %vm282, %v1686, 0
      %v1728 = vsel %vm282, %v1687, 0
      %v1731 = vsel %vm282, %v1688, 0
      %v1734 = vsel %vm282, %v1689, 0
      %v1737 = vsel %vm282, %v1690, 0
      %v1740 = vsel %vm282, %v1691, 0
      %v1743 = vsel %vm282, %v1692, 0
      %v1746 = vsel %vm282, %v1693, 0
      %v1749 = vsel %vm282, %v1694, 0
      %v1752 = vsel %vm282, %v1695, 0
      %v1755 = vsel %vm282, %v1696, 0
      %v1758 = vsel %vm282, %v1697, 0
      %v1761 = vsel %vm282, %v1698, 0
      %v1764 = vsel %vm282, %v1699, 0
      %v1767 = vsel %vm282, %v1700, 0
      %v1770 = vsel %vm282, %v1701, 0
      %v1773 = vsel %vm282, %v1702, 0
      %v1776 = vsel %vm282, %v1703, 0
      %v1779 = vsel %vm282, %v1704, 0
      %v1782 = vsel %vm282, %v1705, 0
      %v1785 = vsel %vm282, %v1706, 0
      %v1788 = vsel %vm282, %v1707, 0
      %v1791 = vsel %vm282, %v1708, 0
      %v1794 = vsel %vm282, %v1709, 0
      %v1797 = vsel %vm282, %v1710, 0
      %v1800 = vsel %vm282, %v1711, 0
      %v1803 = vsel %vm282, %v1712, 0
      %v1806 = vsel %vm282, %v1713, 0
      %v1809 = vsel %vm282, %v1714, 0
      %v1812 = vsel %vm282, %v1715, 0
      %v1815 = vsel %vm282, %v1716, 0
      %v1818 = vsel %vm282, %v1717, 0
      %v1821 = vsel %vm282, %v1718, 0
      %v1824 = vsel %vm282, %v1719, 0
      %v1827 = vsel %vm282, %v1720, 0
      %v1830 = vsel %vm282, %v1721, 0
      %v1833 = vsel %vm391, %v1723, 0
      %1835 = vmatpush.msra.mxu0 0.0
      %1836 = vmatpush.msra.mxu0 0.0
      %1837 = vmatpush.msra.mxu0 0.0
      %1838 = vmatpush.msra.mxu0 0.0
      %1839 = vmatpush.msra.mxu0 0.0
      %1840 = vmatpush.msra.mxu0 0.0
      %1841 = vmatpush.msra.mxu0 0.0
      %1842 = vmatpush.msra.mxu0 0.0
      %1843 = vmatpush.msra.mxu0 0.0
      %1844 = vmatpush.msra.mxu0 0.0
      %1845 = vmatpush.msra.mxu0 0.0
      %1846 = vmatpush.msra.mxu0 0.0
      %1847 = vmatpush.msra.mxu0 0.0
      %1848 = vmatpush.msra.mxu0 0.0
      %1849 = vmatpush.msra.mxu0 0.0
      %1850 = vmatpush.msra.mxu0 %v1833
      %1851 = vmatmul.f32.gmra.mxu0 %v1725
      %v1852 = vpop.f32.mrf.mxu0
      %v1853 = vadd.f32 0.0, %v1852
      %1854 = vmatmul.f32.gmra.mxu0 %v1728
      %v1855 = vpop.f32.mrf.mxu0
      %v1856 = vadd.f32 0.0, %v1855
      %1857 = vmatmul.f32.gmra.mxu0 %v1731
      %v1858 = vpop.f32.mrf.mxu0
      %v1859 = vadd.f32 0.0, %v1858
      %1860 = vmatmul.f32.gmra.mxu0 %v1734
      %v1861 = vpop.f32.mrf.mxu0
      %v1862 = vadd.f32 0.0, %v1861
      %1863 = vmatmul.f32.gmra.mxu0 %v1737
      %v1864 = vpop.f32.mrf.mxu0
      %v1865 = vadd.f32 0.0, %v1864
      %1866 = vmatmul.f32.gmra.mxu0 %v1740
      %v1867 = vpop.f32.mrf.mxu0
      %v1868 = vadd.f32 0.0, %v1867
      %1869 = vmatmul.f32.gmra.mxu0 %v1743
      %v1870 = vpop.f32.mrf.mxu0
      %v1871 = vadd.f32 0.0, %v1870
      %1872 = vmatmul.f32.gmra.mxu0 %v1746
      %v1873 = vpop.f32.mrf.mxu0
      %v1874 = vadd.f32 0.0, %v1873
      %1875 = vmatmul.f32.gmra.mxu0 %v1749
      %v1876 = vpop.f32.mrf.mxu0
      %v1877 = vadd.f32 0.0, %v1876
      %1878 = vmatmul.f32.gmra.mxu0 %v1752
      %v1879 = vpop.f32.mrf.mxu0
      %v1880 = vadd.f32 0.0, %v1879
      %1881 = vmatmul.f32.gmra.mxu0 %v1755
      %v1882 = vpop.f32.mrf.mxu0
      %v1883 = vadd.f32 0.0, %v1882
      %1884 = vmatmul.f32.gmra.mxu0 %v1758
      %v1885 = vpop.f32.mrf.mxu0
      %v1886 = vadd.f32 0.0, %v1885
      %1887 = vmatmul.f32.gmra.mxu0 %v1761
      %v1888 = vpop.f32.mrf.mxu0
      %v1889 = vadd.f32 0.0, %v1888
      %1890 = vmatmul.f32.gmra.mxu0 %v1764
      %v1891 = vpop.f32.mrf.mxu0
      %v1892 = vadd.f32 0.0, %v1891
      %1893 = vmatmul.f32.gmra.mxu0 %v1767
      %v1894 = vpop.f32.mrf.mxu0
      %v1895 = vadd.f32 0.0, %v1894
      %1896 = vmatmul.f32.gmra.mxu0 %v1770
      %v1897 = vpop.f32.mrf.mxu0
      %v1898 = vadd.f32 0.0, %v1897
      %1899 = vmatmul.f32.gmra.mxu0 %v1773
      %v1900 = vpop.f32.mrf.mxu0
      %v1901 = vadd.f32 0.0, %v1900
      %1902 = vmatmul.f32.gmra.mxu0 %v1776
      %v1903 = vpop.f32.mrf.mxu0
      %v1904 = vadd.f32 0.0, %v1903
      %1905 = vmatmul.f32.gmra.mxu0 %v1779
      %v1906 = vpop.f32.mrf.mxu0
      %v1907 = vadd.f32 0.0, %v1906
      %1908 = vmatmul.f32.gmra.mxu0 %v1782
      %v1909 = vpop.f32.mrf.mxu0
      %v1910 = vadd.f32 0.0, %v1909
      %1911 = vmatmul.f32.gmra.mxu0 %v1785
      %v1912 = vpop.f32.mrf.mxu0
      %v1913 = vadd.f32 0.0, %v1912
      %1914 = vmatmul.f32.gmra.mxu0 %v1788
      %v1915 = vpop.f32.mrf.mxu0
      %v1916 = vadd.f32 0.0, %v1915
      %1917 = vmatmul.f32.gmra.mxu0 %v1791
      %v1918 = vpop.f32.mrf.mxu0
      %v1919 = vadd.f32 0.0, %v1918
      %1920 = vmatmul.f32.gmra.mxu0 %v1794
      %v1921 = vpop.f32.mrf.mxu0
      %v1922 = vadd.f32 0.0, %v1921
      %1923 = vmatmul.f32.gmra.mxu0 %v1797
      %v1924 = vpop.f32.mrf.mxu0
      %v1925 = vadd.f32 0.0, %v1924
      %1926 = vmatmul.f32.gmra.mxu0 %v1800
      %v1927 = vpop.f32.mrf.mxu0
      %v1928 = vadd.f32 0.0, %v1927
      %1929 = vmatmul.f32.gmra.mxu0 %v1803
      %v1930 = vpop.f32.mrf.mxu0
      %v1931 = vadd.f32 0.0, %v1930
      %1932 = vmatmul.f32.gmra.mxu0 %v1806
      %v1933 = vpop.f32.mrf.mxu0
      %v1934 = vadd.f32 0.0, %v1933
      %1935 = vmatmul.f32.gmra.mxu0 %v1809
      %v1936 = vpop.f32.mrf.mxu0
      %v1937 = vadd.f32 0.0, %v1936
      %1938 = vmatmul.f32.gmra.mxu0 %v1812
      %v1939 = vpop.f32.mrf.mxu0
      %v1940 = vadd.f32 0.0, %v1939
      %1941 = vmatmul.f32.gmra.mxu0 %v1815
      %v1942 = vpop.f32.mrf.mxu0
      %v1943 = vadd.f32 0.0, %v1942
      %1944 = vmatmul.f32.gmra.mxu0 %v1818
      %v1945 = vpop.f32.mrf.mxu0
      %v1946 = vadd.f32 0.0, %v1945
      %1947 = vmatmul.f32.gmra.mxu0 %v1821
      %v1948 = vpop.f32.mrf.mxu0
      %v1949 = vadd.f32 0.0, %v1948
      %1950 = vmatmul.f32.gmra.mxu0 %v1824
      %v1951 = vpop.f32.mrf.mxu0
      %v1952 = vadd.f32 0.0, %v1951
      %1953 = vmatmul.f32.gmra.mxu0 %v1827
      %v1954 = vpop.f32.mrf.mxu0
      %v1955 = vadd.f32 0.0, %v1954
      %1956 = vmatmul.f32.gmra.mxu0 %v1830
      %v1957 = vpop.f32.mrf.mxu0
      %v1958 = vadd.f32 0.0, %v1957
      %1959 = vdwg.mxu0
      %v1960 = vadd.f32 %v1650, %v1853
      %v1961 = vadd.f32 %v1651, %v1856
      %v1962 = vadd.f32 %v1652, %v1859
      %v1963 = vadd.f32 %v1653, %v1862
      %v1964 = vadd.f32 %v1654, %v1865
      %v1965 = vadd.f32 %v1655, %v1868
      %v1966 = vadd.f32 %v1656, %v1871
      %v1967 = vadd.f32 %v1657, %v1874
      %v1968 = vadd.f32 %v1658, %v1877
      %v1969 = vadd.f32 %v1659, %v1880
      %v1970 = vadd.f32 %v1660, %v1883
      %v1971 = vadd.f32 %v1661, %v1886
      %v1972 = vadd.f32 %v1662, %v1889
      %v1973 = vadd.f32 %v1663, %v1892
      %v1974 = vadd.f32 %v1664, %v1895
      %v1975 = vadd.f32 %v1665, %v1898
      %v1976 = vadd.f32 %v1666, %v1901
      %v1977 = vadd.f32 %v1667, %v1904
      %v1978 = vadd.f32 %v1668, %v1907
      %v1979 = vadd.f32 %v1669, %v1910
      %v1980 = vadd.f32 %v1670, %v1913
      %v1981 = vadd.f32 %v1671, %v1916
      %v1982 = vadd.f32 %v1672, %v1919
      %v1983 = vadd.f32 %v1673, %v1922
      %v1984 = vadd.f32 %v1674, %v1925
      %v1985 = vadd.f32 %v1675, %v1928
      %v1986 = vadd.f32 %v1676, %v1931
      %v1987 = vadd.f32 %v1677, %v1934
      %v1988 = vadd.f32 %v1678, %v1937
      %v1989 = vadd.f32 %v1679, %v1940
      %v1990 = vadd.f32 %v1680, %v1943
      %v1991 = vadd.f32 %v1681, %v1946
      %v1992 = vadd.f32 %v1682, %v1949
      %v1993 = vadd.f32 %v1683, %v1952
      %v1994 = vadd.f32 %v1684, %v1955
      %v1995 = vadd.f32 %v1685, %v1958
      %v1996 = vld [vmem:[%s197 + $0x24] sm:$0xff]
      %v1997 = vld [vmem:[%s197 + $0x2c] sm:$0xff]
      %v1998 = vld [vmem:[%s197 + $0x34] sm:$0xff]
      %v1999 = vld [vmem:[%s197 + $0x3c] sm:$0xff]
      %v2000 = vld [vmem:[%s197 + $0x44] sm:$0xff]
      %v2001 = vld [vmem:[%s197 + $0x4c] sm:$0xff]
      %v2002 = vld [vmem:[%s197 + $0x54] sm:$0xff]
      %v2003 = vld [vmem:[%s197 + $0x5c] sm:$0xff]
      %v2004 = vld [vmem:[%s197 + $0x64] sm:$0xff]
      %v2005 = vld [vmem:[%s197 + $0x6c] sm:$0xff]
      %v2006 = vld [vmem:[%s197 + $0x74] sm:$0xff]
      %v2007 = vld [vmem:[%s197 + $0x7c] sm:$0xff]
      %v2008 = vld [vmem:[%s197 + $0x84] sm:$0xff]
      %v2009 = vld [vmem:[%s197 + $0x8c] sm:$0xff]
      %v2010 = vld [vmem:[%s197 + $0x94] sm:$0xff]
      %v2011 = vld [vmem:[%s197 + $0x9c] sm:$0xff]
      %v2012 = vld [vmem:[%s197 + $0xa4] sm:$0xff]
      %v2013 = vld [vmem:[%s197 + $0xac] sm:$0xff]
      %v2014 = vld [vmem:[%s197 + $0xb4] sm:$0xff]
      %v2015 = vld [vmem:[%s197 + $0xbc] sm:$0xff]
      %v2016 = vld [vmem:[%s197 + $0xc4] sm:$0xff]
      %v2017 = vld [vmem:[%s197 + $0xcc] sm:$0xff]
      %v2018 = vld [vmem:[%s197 + $0xd4] sm:$0xff]
      %v2019 = vld [vmem:[%s197 + $0xdc] sm:$0xff]
      %v2020 = vld [vmem:[%s197 + $0xe4] sm:$0xff]
      %v2021 = vld [vmem:[%s197 + $0xec] sm:$0xff]
      %v2022 = vld [vmem:[%s197 + $0xf4] sm:$0xff]
      %v2023 = vld [vmem:[%s197 + $0xfc] sm:$0xff]
      %v2024 = vld [vmem:[%s197 + $0x104] sm:$0xff]
      %v2025 = vld [vmem:[%s197 + $0x10c] sm:$0xff]
      %v2026 = vld [vmem:[%s197 + $0x114] sm:$0xff]
      %v2027 = vld [vmem:[%s197 + $0x11c] sm:$0xff]
      %v2028 = vld [vmem:[%s197 + $0x124] sm:$0xff]
      %v2029 = vld [vmem:[%s197 + $0x12c] sm:$0xff]
      %v2030 = vld [vmem:[%s197 + $0x134] sm:$0xff]
      %v2031 = vld [vmem:[%s197 + $0x13c] sm:$0xff]
      %s2032 = scalar_lea.vmem %s1, 24
      %v2033 = vld [vmem:[%s2032] sm:$0xf]
      %v2035 = vsel %vm282, %v1996, 0
      %v2038 = vsel %vm282, %v1997, 0
      %v2041 = vsel %vm282, %v1998, 0
      %v2044 = vsel %vm282, %v1999, 0
      %v2047 = vsel %vm282, %v2000, 0
      %v2050 = vsel %vm282, %v2001, 0
      %v2053 = vsel %vm282, %v2002, 0
      %v2056 = vsel %vm282, %v2003, 0
      %v2059 = vsel %vm282, %v2004, 0
      %v2062 = vsel %vm282, %v2005, 0
      %v2065 = vsel %vm282, %v2006, 0
      %v2068 = vsel %vm282, %v2007, 0
      %v2071 = vsel %vm282, %v2008, 0
      %v2074 = vsel %vm282, %v2009, 0
      %v2077 = vsel %vm282, %v2010, 0
      %v2080 = vsel %vm282, %v2011, 0
      %v2083 = vsel %vm282, %v2012, 0
      %v2086 = vsel %vm282, %v2013, 0
      %v2089 = vsel %vm282, %v2014, 0
      %v2092 = vsel %vm282, %v2015, 0
      %v2095 = vsel %vm282, %v2016, 0
      %v2098 = vsel %vm282, %v2017, 0
      %v2101 = vsel %vm282, %v2018, 0
      %v2104 = vsel %vm282, %v2019, 0
      %v2107 = vsel %vm282, %v2020, 0
      %v2110 = vsel %vm282, %v2021, 0
      %v2113 = vsel %vm282, %v2022, 0
      %v2116 = vsel %vm282, %v2023, 0
      %v2119 = vsel %vm282, %v2024, 0
      %v2122 = vsel %vm282, %v2025, 0
      %v2125 = vsel %vm282, %v2026, 0
      %v2128 = vsel %vm282, %v2027, 0
      %v2131 = vsel %vm282, %v2028, 0
      %v2134 = vsel %vm282, %v2029, 0
      %v2137 = vsel %vm282, %v2030, 0
      %v2140 = vsel %vm282, %v2031, 0
      %v2143 = vsel %vm391, %v2033, 0
      %2145 = vmatpush.msra.mxu0 0.0
      %2146 = vmatpush.msra.mxu0 0.0
      %2147 = vmatpush.msra.mxu0 0.0
      %2148 = vmatpush.msra.mxu0 0.0
      %2149 = vmatpush.msra.mxu0 0.0
      %2150 = vmatpush.msra.mxu0 0.0
      %2151 = vmatpush.msra.mxu0 0.0
      %2152 = vmatpush.msra.mxu0 0.0
      %2153 = vmatpush.msra.mxu0 0.0
      %2154 = vmatpush.msra.mxu0 0.0
      %2155 = vmatpush.msra.mxu0 0.0
      %2156 = vmatpush.msra.mxu0 0.0
      %2157 = vmatpush.msra.mxu0 0.0
      %2158 = vmatpush.msra.mxu0 0.0
      %2159 = vmatpush.msra.mxu0 0.0
      %2160 = vmatpush.msra.mxu0 %v2143
      %2161 = vmatmul.f32.gmra.mxu0 %v2035
      %v2162 = vpop.f32.mrf.mxu0
      %v2163 = vadd.f32 0.0, %v2162
      %2164 = vmatmul.f32.gmra.mxu0 %v2038
      %v2165 = vpop.f32.mrf.mxu0
      %v2166 = vadd.f32 0.0, %v2165
      %2167 = vmatmul.f32.gmra.mxu0 %v2041
      %v2168 = vpop.f32.mrf.mxu0
      %v2169 = vadd.f32 0.0, %v2168
      %2170 = vmatmul.f32.gmra.mxu0 %v2044
      %v2171 = vpop.f32.mrf.mxu0
      %v2172 = vadd.f32 0.0, %v2171
      %2173 = vmatmul.f32.gmra.mxu0 %v2047
      %v2174 = vpop.f32.mrf.mxu0
      %v2175 = vadd.f32 0.0, %v2174
      %2176 = vmatmul.f32.gmra.mxu0 %v2050
      %v2177 = vpop.f32.mrf.mxu0
      %v2178 = vadd.f32 0.0, %v2177
      %2179 = vmatmul.f32.gmra.mxu0 %v2053
      %v2180 = vpop.f32.mrf.mxu0
      %v2181 = vadd.f32 0.0, %v2180
      %2182 = vmatmul.f32.gmra.mxu0 %v2056
      %v2183 = vpop.f32.mrf.mxu0
      %v2184 = vadd.f32 0.0, %v2183
      %2185 = vmatmul.f32.gmra.mxu0 %v2059
      %v2186 = vpop.f32.mrf.mxu0
      %v2187 = vadd.f32 0.0, %v2186
      %2188 = vmatmul.f32.gmra.mxu0 %v2062
      %v2189 = vpop.f32.mrf.mxu0
      %v2190 = vadd.f32 0.0, %v2189
      %2191 = vmatmul.f32.gmra.mxu0 %v2065
      %v2192 = vpop.f32.mrf.mxu0
      %v2193 = vadd.f32 0.0, %v2192
      %2194 = vmatmul.f32.gmra.mxu0 %v2068
      %v2195 = vpop.f32.mrf.mxu0
      %v2196 = vadd.f32 0.0, %v2195
      %2197 = vmatmul.f32.gmra.mxu0 %v2071
      %v2198 = vpop.f32.mrf.mxu0
      %v2199 = vadd.f32 0.0, %v2198
      %2200 = vmatmul.f32.gmra.mxu0 %v2074
      %v2201 = vpop.f32.mrf.mxu0
      %v2202 = vadd.f32 0.0, %v2201
      %2203 = vmatmul.f32.gmra.mxu0 %v2077
      %v2204 = vpop.f32.mrf.mxu0
      %v2205 = vadd.f32 0.0, %v2204
      %2206 = vmatmul.f32.gmra.mxu0 %v2080
      %v2207 = vpop.f32.mrf.mxu0
      %v2208 = vadd.f32 0.0, %v2207
      %2209 = vmatmul.f32.gmra.mxu0 %v2083
      %v2210 = vpop.f32.mrf.mxu0
      %v2211 = vadd.f32 0.0, %v2210
      %2212 = vmatmul.f32.gmra.mxu0 %v2086
      %v2213 = vpop.f32.mrf.mxu0
      %v2214 = vadd.f32 0.0, %v2213
      %2215 = vmatmul.f32.gmra.mxu0 %v2089
      %v2216 = vpop.f32.mrf.mxu0
      %v2217 = vadd.f32 0.0, %v2216
      %2218 = vmatmul.f32.gmra.mxu0 %v2092
      %v2219 = vpop.f32.mrf.mxu0
      %v2220 = vadd.f32 0.0, %v2219
      %2221 = vmatmul.f32.gmra.mxu0 %v2095
      %v2222 = vpop.f32.mrf.mxu0
      %v2223 = vadd.f32 0.0, %v2222
      %2224 = vmatmul.f32.gmra.mxu0 %v2098
      %v2225 = vpop.f32.mrf.mxu0
      %v2226 = vadd.f32 0.0, %v2225
      %2227 = vmatmul.f32.gmra.mxu0 %v2101
      %v2228 = vpop.f32.mrf.mxu0
      %v2229 = vadd.f32 0.0, %v2228
      %2230 = vmatmul.f32.gmra.mxu0 %v2104
      %v2231 = vpop.f32.mrf.mxu0
      %v2232 = vadd.f32 0.0, %v2231
      %2233 = vmatmul.f32.gmra.mxu0 %v2107
      %v2234 = vpop.f32.mrf.mxu0
      %v2235 = vadd.f32 0.0, %v2234
      %2236 = vmatmul.f32.gmra.mxu0 %v2110
      %v2237 = vpop.f32.mrf.mxu0
      %v2238 = vadd.f32 0.0, %v2237
      %2239 = vmatmul.f32.gmra.mxu0 %v2113
      %v2240 = vpop.f32.mrf.mxu0
      %v2241 = vadd.f32 0.0, %v2240
      %2242 = vmatmul.f32.gmra.mxu0 %v2116
      %v2243 = vpop.f32.mrf.mxu0
      %v2244 = vadd.f32 0.0, %v2243
      %2245 = vmatmul.f32.gmra.mxu0 %v2119
      %v2246 = vpop.f32.mrf.mxu0
      %v2247 = vadd.f32 0.0, %v2246
      %2248 = vmatmul.f32.gmra.mxu0 %v2122
      %v2249 = vpop.f32.mrf.mxu0
      %v2250 = vadd.f32 0.0, %v2249
      %2251 = vmatmul.f32.gmra.mxu0 %v2125
      %v2252 = vpop.f32.mrf.mxu0
      %v2253 = vadd.f32 0.0, %v2252
      %2254 = vmatmul.f32.gmra.mxu0 %v2128
      %v2255 = vpop.f32.mrf.mxu0
      %v2256 = vadd.f32 0.0, %v2255
      %2257 = vmatmul.f32.gmra.mxu0 %v2131
      %v2258 = vpop.f32.mrf.mxu0
      %v2259 = vadd.f32 0.0, %v2258
      %2260 = vmatmul.f32.gmra.mxu0 %v2134
      %v2261 = vpop.f32.mrf.mxu0
      %v2262 = vadd.f32 0.0, %v2261
      %2263 = vmatmul.f32.gmra.mxu0 %v2137
      %v2264 = vpop.f32.mrf.mxu0
      %v2265 = vadd.f32 0.0, %v2264
      %2266 = vmatmul.f32.gmra.mxu0 %v2140
      %v2267 = vpop.f32.mrf.mxu0
      %v2268 = vadd.f32 0.0, %v2267
      %2269 = vdwg.mxu0
      %v2270 = vadd.f32 %v1960, %v2163
      %v2271 = vadd.f32 %v1961, %v2166
      %v2272 = vadd.f32 %v1962, %v2169
      %v2273 = vadd.f32 %v1963, %v2172
      %v2274 = vadd.f32 %v1964, %v2175
      %v2275 = vadd.f32 %v1965, %v2178
      %v2276 = vadd.f32 %v1966, %v2181
      %v2277 = vadd.f32 %v1967, %v2184
      %v2278 = vadd.f32 %v1968, %v2187
      %v2279 = vadd.f32 %v1969, %v2190
      %v2280 = vadd.f32 %v1970, %v2193
      %v2281 = vadd.f32 %v1971, %v2196
      %v2282 = vadd.f32 %v1972, %v2199
      %v2283 = vadd.f32 %v1973, %v2202
      %v2284 = vadd.f32 %v1974, %v2205
      %v2285 = vadd.f32 %v1975, %v2208
      %v2286 = vadd.f32 %v1976, %v2211
      %v2287 = vadd.f32 %v1977, %v2214
      %v2288 = vadd.f32 %v1978, %v2217
      %v2289 = vadd.f32 %v1979, %v2220
      %v2290 = vadd.f32 %v1980, %v2223
      %v2291 = vadd.f32 %v1981, %v2226
      %v2292 = vadd.f32 %v1982, %v2229
      %v2293 = vadd.f32 %v1983, %v2232
      %v2294 = vadd.f32 %v1984, %v2235
      %v2295 = vadd.f32 %v1985, %v2238
      %v2296 = vadd.f32 %v1986, %v2241
      %v2297 = vadd.f32 %v1987, %v2244
      %v2298 = vadd.f32 %v1988, %v2247
      %v2299 = vadd.f32 %v1989, %v2250
      %v2300 = vadd.f32 %v1990, %v2253
      %v2301 = vadd.f32 %v1991, %v2256
      %v2302 = vadd.f32 %v1992, %v2259
      %v2303 = vadd.f32 %v1993, %v2262
      %v2304 = vadd.f32 %v1994, %v2265
      %v2305 = vadd.f32 %v1995, %v2268
      %v2306 = vld [vmem:[%s197 + $0x25] sm:$0xff]
      %v2307 = vld [vmem:[%s197 + $0x2d] sm:$0xff]
      %v2308 = vld [vmem:[%s197 + $0x35] sm:$0xff]
      %v2309 = vld [vmem:[%s197 + $0x3d] sm:$0xff]
      %v2310 = vld [vmem:[%s197 + $0x45] sm:$0xff]
      %v2311 = vld [vmem:[%s197 + $0x4d] sm:$0xff]
      %v2312 = vld [vmem:[%s197 + $0x55] sm:$0xff]
      %v2313 = vld [vmem:[%s197 + $0x5d] sm:$0xff]
      %v2314 = vld [vmem:[%s197 + $0x65] sm:$0xff]
      %v2315 = vld [vmem:[%s197 + $0x6d] sm:$0xff]
      %v2316 = vld [vmem:[%s197 + $0x75] sm:$0xff]
      %v2317 = vld [vmem:[%s197 + $0x7d] sm:$0xff]
      %v2318 = vld [vmem:[%s197 + $0x85] sm:$0xff]
      %v2319 = vld [vmem:[%s197 + $0x8d] sm:$0xff]
      %v2320 = vld [vmem:[%s197 + $0x95] sm:$0xff]
      %v2321 = vld [vmem:[%s197 + $0x9d] sm:$0xff]
      %v2322 = vld [vmem:[%s197 + $0xa5] sm:$0xff]
      %v2323 = vld [vmem:[%s197 + $0xad] sm:$0xff]
      %v2324 = vld [vmem:[%s197 + $0xb5] sm:$0xff]
      %v2325 = vld [vmem:[%s197 + $0xbd] sm:$0xff]
      %v2326 = vld [vmem:[%s197 + $0xc5] sm:$0xff]
      %v2327 = vld [vmem:[%s197 + $0xcd] sm:$0xff]
      %v2328 = vld [vmem:[%s197 + $0xd5] sm:$0xff]
      %v2329 = vld [vmem:[%s197 + $0xdd] sm:$0xff]
      %v2330 = vld [vmem:[%s197 + $0xe5] sm:$0xff]
      %v2331 = vld [vmem:[%s197 + $0xed] sm:$0xff]
      %v2332 = vld [vmem:[%s197 + $0xf5] sm:$0xff]
      %v2333 = vld [vmem:[%s197 + $0xfd] sm:$0xff]
      %v2334 = vld [vmem:[%s197 + $0x105] sm:$0xff]
      %v2335 = vld [vmem:[%s197 + $0x10d] sm:$0xff]
      %v2336 = vld [vmem:[%s197 + $0x115] sm:$0xff]
      %v2337 = vld [vmem:[%s197 + $0x11d] sm:$0xff]
      %v2338 = vld [vmem:[%s197 + $0x125] sm:$0xff]
      %v2339 = vld [vmem:[%s197 + $0x12d] sm:$0xff]
      %v2340 = vld [vmem:[%s197 + $0x135] sm:$0xff]
      %v2341 = vld [vmem:[%s197 + $0x13d] sm:$0xff]
      %s2342 = scalar_lea.vmem %s1, 28
      %v2343 = vld [vmem:[%s2342] sm:$0xf]
      %v2345 = vsel %vm282, %v2306, 0
      %v2348 = vsel %vm282, %v2307, 0
      %v2351 = vsel %vm282, %v2308, 0
      %v2354 = vsel %vm282, %v2309, 0
      %v2357 = vsel %vm282, %v2310, 0
      %v2360 = vsel %vm282, %v2311, 0
      %v2363 = vsel %vm282, %v2312, 0
      %v2366 = vsel %vm282, %v2313, 0
      %v2369 = vsel %vm282, %v2314, 0
      %v2372 = vsel %vm282, %v2315, 0
      %v2375 = vsel %vm282, %v2316, 0
      %v2378 = vsel %vm282, %v2317, 0
      %v2381 = vsel %vm282, %v2318, 0
      %v2384 = vsel %vm282, %v2319, 0
      %v2387 = vsel %vm282, %v2320, 0
      %v2390 = vsel %vm282, %v2321, 0
      %v2393 = vsel %vm282, %v2322, 0
      %v2396 = vsel %vm282, %v2323, 0
      %v2399 = vsel %vm282, %v2324, 0
      %v2402 = vsel %vm282, %v2325, 0
      %v2405 = vsel %vm282, %v2326, 0
      %v2408 = vsel %vm282, %v2327, 0
      %v2411 = vsel %vm282, %v2328, 0
      %v2414 = vsel %vm282, %v2329, 0
      %v2417 = vsel %vm282, %v2330, 0
      %v2420 = vsel %vm282, %v2331, 0
      %v2423 = vsel %vm282, %v2332, 0
      %v2426 = vsel %vm282, %v2333, 0
      %v2429 = vsel %vm282, %v2334, 0
      %v2432 = vsel %vm282, %v2335, 0
      %v2435 = vsel %vm282, %v2336, 0
      %v2438 = vsel %vm282, %v2337, 0
      %v2441 = vsel %vm282, %v2338, 0
      %v2444 = vsel %vm282, %v2339, 0
      %v2447 = vsel %vm282, %v2340, 0
      %v2450 = vsel %vm282, %v2341, 0
      %v2453 = vsel %vm391, %v2343, 0
      %2455 = vmatpush.msra.mxu0 0.0
      %2456 = vmatpush.msra.mxu0 0.0
      %2457 = vmatpush.msra.mxu0 0.0
      %2458 = vmatpush.msra.mxu0 0.0
      %2459 = vmatpush.msra.mxu0 0.0
      %2460 = vmatpush.msra.mxu0 0.0
      %2461 = vmatpush.msra.mxu0 0.0
      %2462 = vmatpush.msra.mxu0 0.0
      %2463 = vmatpush.msra.mxu0 0.0
      %2464 = vmatpush.msra.mxu0 0.0
      %2465 = vmatpush.msra.mxu0 0.0
      %2466 = vmatpush.msra.mxu0 0.0
      %2467 = vmatpush.msra.mxu0 0.0
      %2468 = vmatpush.msra.mxu0 0.0
      %2469 = vmatpush.msra.mxu0 0.0
      %2470 = vmatpush.msra.mxu0 %v2453
      %2471 = vmatmul.f32.gmra.mxu0 %v2345
      %v2472 = vpop.f32.mrf.mxu0
      %v2473 = vadd.f32 0.0, %v2472
      %2474 = vmatmul.f32.gmra.mxu0 %v2348
      %v2475 = vpop.f32.mrf.mxu0
      %v2476 = vadd.f32 0.0, %v2475
      %2477 = vmatmul.f32.gmra.mxu0 %v2351
      %v2478 = vpop.f32.mrf.mxu0
      %v2479 = vadd.f32 0.0, %v2478
      %2480 = vmatmul.f32.gmra.mxu0 %v2354
      %v2481 = vpop.f32.mrf.mxu0
      %v2482 = vadd.f32 0.0, %v2481
      %2483 = vmatmul.f32.gmra.mxu0 %v2357
      %v2484 = vpop.f32.mrf.mxu0
      %v2485 = vadd.f32 0.0, %v2484
      %2486 = vmatmul.f32.gmra.mxu0 %v2360
      %v2487 = vpop.f32.mrf.mxu0
      %v2488 = vadd.f32 0.0, %v2487
      %2489 = vmatmul.f32.gmra.mxu0 %v2363
      %v2490 = vpop.f32.mrf.mxu0
      %v2491 = vadd.f32 0.0, %v2490
      %2492 = vmatmul.f32.gmra.mxu0 %v2366
      %v2493 = vpop.f32.mrf.mxu0
      %v2494 = vadd.f32 0.0, %v2493
      %2495 = vmatmul.f32.gmra.mxu0 %v2369
      %v2496 = vpop.f32.mrf.mxu0
      %v2497 = vadd.f32 0.0, %v2496
      %2498 = vmatmul.f32.gmra.mxu0 %v2372
      %v2499 = vpop.f32.mrf.mxu0
      %v2500 = vadd.f32 0.0, %v2499
      %2501 = vmatmul.f32.gmra.mxu0 %v2375
      %v2502 = vpop.f32.mrf.mxu0
      %v2503 = vadd.f32 0.0, %v2502
      %2504 = vmatmul.f32.gmra.mxu0 %v2378
      %v2505 = vpop.f32.mrf.mxu0
      %v2506 = vadd.f32 0.0, %v2505
      %2507 = vmatmul.f32.gmra.mxu0 %v2381
      %v2508 = vpop.f32.mrf.mxu0
      %v2509 = vadd.f32 0.0, %v2508
      %2510 = vmatmul.f32.gmra.mxu0 %v2384
      %v2511 = vpop.f32.mrf.mxu0
      %v2512 = vadd.f32 0.0, %v2511
      %2513 = vmatmul.f32.gmra.mxu0 %v2387
      %v2514 = vpop.f32.mrf.mxu0
      %v2515 = vadd.f32 0.0, %v2514
      %2516 = vmatmul.f32.gmra.mxu0 %v2390
      %v2517 = vpop.f32.mrf.mxu0
      %v2518 = vadd.f32 0.0, %v2517
      %2519 = vmatmul.f32.gmra.mxu0 %v2393
      %v2520 = vpop.f32.mrf.mxu0
      %v2521 = vadd.f32 0.0, %v2520
      %2522 = vmatmul.f32.gmra.mxu0 %v2396
      %v2523 = vpop.f32.mrf.mxu0
      %v2524 = vadd.f32 0.0, %v2523
      %2525 = vmatmul.f32.gmra.mxu0 %v2399
      %v2526 = vpop.f32.mrf.mxu0
      %v2527 = vadd.f32 0.0, %v2526
      %2528 = vmatmul.f32.gmra.mxu0 %v2402
      %v2529 = vpop.f32.mrf.mxu0
      %v2530 = vadd.f32 0.0, %v2529
      %2531 = vmatmul.f32.gmra.mxu0 %v2405
      %v2532 = vpop.f32.mrf.mxu0
      %v2533 = vadd.f32 0.0, %v2532
      %2534 = vmatmul.f32.gmra.mxu0 %v2408
      %v2535 = vpop.f32.mrf.mxu0
      %v2536 = vadd.f32 0.0, %v2535
      %2537 = vmatmul.f32.gmra.mxu0 %v2411
      %v2538 = vpop.f32.mrf.mxu0
      %v2539 = vadd.f32 0.0, %v2538
      %2540 = vmatmul.f32.gmra.mxu0 %v2414
      %v2541 = vpop.f32.mrf.mxu0
      %v2542 = vadd.f32 0.0, %v2541
      %2543 = vmatmul.f32.gmra.mxu0 %v2417
      %v2544 = vpop.f32.mrf.mxu0
      %v2545 = vadd.f32 0.0, %v2544
      %2546 = vmatmul.f32.gmra.mxu0 %v2420
      %v2547 = vpop.f32.mrf.mxu0
      %v2548 = vadd.f32 0.0, %v2547
      %2549 = vmatmul.f32.gmra.mxu0 %v2423
      %v2550 = vpop.f32.mrf.mxu0
      %v2551 = vadd.f32 0.0, %v2550
      %2552 = vmatmul.f32.gmra.mxu0 %v2426
      %v2553 = vpop.f32.mrf.mxu0
      %v2554 = vadd.f32 0.0, %v2553
      %2555 = vmatmul.f32.gmra.mxu0 %v2429
      %v2556 = vpop.f32.mrf.mxu0
      %v2557 = vadd.f32 0.0, %v2556
      %2558 = vmatmul.f32.gmra.mxu0 %v2432
      %v2559 = vpop.f32.mrf.mxu0
      %v2560 = vadd.f32 0.0, %v2559
      %2561 = vmatmul.f32.gmra.mxu0 %v2435
      %v2562 = vpop.f32.mrf.mxu0
      %v2563 = vadd.f32 0.0, %v2562
      %2564 = vmatmul.f32.gmra.mxu0 %v2438
      %v2565 = vpop.f32.mrf.mxu0
      %v2566 = vadd.f32 0.0, %v2565
      %2567 = vmatmul.f32.gmra.mxu0 %v2441
      %v2568 = vpop.f32.mrf.mxu0
      %v2569 = vadd.f32 0.0, %v2568
      %2570 = vmatmul.f32.gmra.mxu0 %v2444
      %v2571 = vpop.f32.mrf.mxu0
      %v2572 = vadd.f32 0.0, %v2571
      %2573 = vmatmul.f32.gmra.mxu0 %v2447
      %v2574 = vpop.f32.mrf.mxu0
      %v2575 = vadd.f32 0.0, %v2574
      %2576 = vmatmul.f32.gmra.mxu0 %v2450
      %v2577 = vpop.f32.mrf.mxu0
      %v2578 = vadd.f32 0.0, %v2577
      %2579 = vdwg.mxu0
      %v2580 = vadd.f32 %v2270, %v2473
      %v2581 = vadd.f32 %v2271, %v2476
      %v2582 = vadd.f32 %v2272, %v2479
      %v2583 = vadd.f32 %v2273, %v2482
      %v2584 = vadd.f32 %v2274, %v2485
      %v2585 = vadd.f32 %v2275, %v2488
      %v2586 = vadd.f32 %v2276, %v2491
      %v2587 = vadd.f32 %v2277, %v2494
      %v2588 = vadd.f32 %v2278, %v2497
      %v2589 = vadd.f32 %v2279, %v2500
      %v2590 = vadd.f32 %v2280, %v2503
      %v2591 = vadd.f32 %v2281, %v2506
      %v2592 = vadd.f32 %v2282, %v2509
      %v2593 = vadd.f32 %v2283, %v2512
      %v2594 = vadd.f32 %v2284, %v2515
      %v2595 = vadd.f32 %v2285, %v2518
      %v2596 = vadd.f32 %v2286, %v2521
      %v2597 = vadd.f32 %v2287, %v2524
      %v2598 = vadd.f32 %v2288, %v2527
      %v2599 = vadd.f32 %v2289, %v2530
      %v2600 = vadd.f32 %v2290, %v2533
      %v2601 = vadd.f32 %v2291, %v2536
      %v2602 = vadd.f32 %v2292, %v2539
      %v2603 = vadd.f32 %v2293, %v2542
      %v2604 = vadd.f32 %v2294, %v2545
      %v2605 = vadd.f32 %v2295, %v2548
      %v2606 = vadd.f32 %v2296, %v2551
      %v2607 = vadd.f32 %v2297, %v2554
      %v2608 = vadd.f32 %v2298, %v2557
      %v2609 = vadd.f32 %v2299, %v2560
      %v2610 = vadd.f32 %v2300, %v2563
      %v2611 = vadd.f32 %v2301, %v2566
      %v2612 = vadd.f32 %v2302, %v2569
      %v2613 = vadd.f32 %v2303, %v2572
      %v2614 = vadd.f32 %v2304, %v2575
      %v2615 = vadd.f32 %v2305, %v2578
      %v2616 = vld [vmem:[%s197 + $0x26] sm:$0xff]
      %v2617 = vld [vmem:[%s197 + $0x2e] sm:$0xff]
      %v2618 = vld [vmem:[%s197 + $0x36] sm:$0xff]
      %v2619 = vld [vmem:[%s197 + $0x3e] sm:$0xff]
      %v2620 = vld [vmem:[%s197 + $0x46] sm:$0xff]
      %v2621 = vld [vmem:[%s197 + $0x4e] sm:$0xff]
      %v2622 = vld [vmem:[%s197 + $0x56] sm:$0xff]
      %v2623 = vld [vmem:[%s197 + $0x5e] sm:$0xff]
      %v2624 = vld [vmem:[%s197 + $0x66] sm:$0xff]
      %v2625 = vld [vmem:[%s197 + $0x6e] sm:$0xff]
      %v2626 = vld [vmem:[%s197 + $0x76] sm:$0xff]
      %v2627 = vld [vmem:[%s197 + $0x7e] sm:$0xff]
      %v2628 = vld [vmem:[%s197 + $0x86] sm:$0xff]
      %v2629 = vld [vmem:[%s197 + $0x8e] sm:$0xff]
      %v2630 = vld [vmem:[%s197 + $0x96] sm:$0xff]
      %v2631 = vld [vmem:[%s197 + $0x9e] sm:$0xff]
      %v2632 = vld [vmem:[%s197 + $0xa6] sm:$0xff]
      %v2633 = vld [vmem:[%s197 + $0xae] sm:$0xff]
      %v2634 = vld [vmem:[%s197 + $0xb6] sm:$0xff]
      %v2635 = vld [vmem:[%s197 + $0xbe] sm:$0xff]
      %v2636 = vld [vmem:[%s197 + $0xc6] sm:$0xff]
      %v2637 = vld [vmem:[%s197 + $0xce] sm:$0xff]
      %v2638 = vld [vmem:[%s197 + $0xd6] sm:$0xff]
      %v2639 = vld [vmem:[%s197 + $0xde] sm:$0xff]
      %v2640 = vld [vmem:[%s197 + $0xe6] sm:$0xff]
      %v2641 = vld [vmem:[%s197 + $0xee] sm:$0xff]
      %v2642 = vld [vmem:[%s197 + $0xf6] sm:$0xff]
      %v2643 = vld [vmem:[%s197 + $0xfe] sm:$0xff]
      %v2644 = vld [vmem:[%s197 + $0x106] sm:$0xff]
      %v2645 = vld [vmem:[%s197 + $0x10e] sm:$0xff]
      %v2646 = vld [vmem:[%s197 + $0x116] sm:$0xff]
      %v2647 = vld [vmem:[%s197 + $0x11e] sm:$0xff]
      %v2648 = vld [vmem:[%s197 + $0x126] sm:$0xff]
      %v2649 = vld [vmem:[%s197 + $0x12e] sm:$0xff]
      %v2650 = vld [vmem:[%s197 + $0x136] sm:$0xff]
      %v2651 = vld [vmem:[%s197 + $0x13e] sm:$0xff]
      %s2652 = scalar_lea.vmem %s1, 32
      %v2653 = vld [vmem:[%s2652] sm:$0xf]
      %v2655 = vsel %vm282, %v2616, 0
      %v2658 = vsel %vm282, %v2617, 0
      %v2661 = vsel %vm282, %v2618, 0
      %v2664 = vsel %vm282, %v2619, 0
      %v2667 = vsel %vm282, %v2620, 0
      %v2670 = vsel %vm282, %v2621, 0
      %v2673 = vsel %vm282, %v2622, 0
      %v2676 = vsel %vm282, %v2623, 0
      %v2679 = vsel %vm282, %v2624, 0
      %v2682 = vsel %vm282, %v2625, 0
      %v2685 = vsel %vm282, %v2626, 0
      %v2688 = vsel %vm282, %v2627, 0
      %v2691 = vsel %vm282, %v2628, 0
      %v2694 = vsel %vm282, %v2629, 0
      %v2697 = vsel %vm282, %v2630, 0
      %v2700 = vsel %vm282, %v2631, 0
      %v2703 = vsel %vm282, %v2632, 0
      %v2706 = vsel %vm282, %v2633, 0
      %v2709 = vsel %vm282, %v2634, 0
      %v2712 = vsel %vm282, %v2635, 0
      %v2715 = vsel %vm282, %v2636, 0
      %v2718 = vsel %vm282, %v2637, 0
      %v2721 = vsel %vm282, %v2638, 0
      %v2724 = vsel %vm282, %v2639, 0
      %v2727 = vsel %vm282, %v2640, 0
      %v2730 = vsel %vm282, %v2641, 0
      %v2733 = vsel %vm282, %v2642, 0
      %v2736 = vsel %vm282, %v2643, 0
      %v2739 = vsel %vm282, %v2644, 0
      %v2742 = vsel %vm282, %v2645, 0
      %v2745 = vsel %vm282, %v2646, 0
      %v2748 = vsel %vm282, %v2647, 0
      %v2751 = vsel %vm282, %v2648, 0
      %v2754 = vsel %vm282, %v2649, 0
      %v2757 = vsel %vm282, %v2650, 0
      %v2760 = vsel %vm282, %v2651, 0
      %v2763 = vsel %vm391, %v2653, 0
      %2765 = vmatpush.msra.mxu0 0.0
      %2766 = vmatpush.msra.mxu0 0.0
      %2767 = vmatpush.msra.mxu0 0.0
      %2768 = vmatpush.msra.mxu0 0.0
      %2769 = vmatpush.msra.mxu0 0.0
      %2770 = vmatpush.msra.mxu0 0.0
      %2771 = vmatpush.msra.mxu0 0.0
      %2772 = vmatpush.msra.mxu0 0.0
      %2773 = vmatpush.msra.mxu0 0.0
      %2774 = vmatpush.msra.mxu0 0.0
      %2775 = vmatpush.msra.mxu0 0.0
      %2776 = vmatpush.msra.mxu0 0.0
      %2777 = vmatpush.msra.mxu0 0.0
      %2778 = vmatpush.msra.mxu0 0.0
      %2779 = vmatpush.msra.mxu0 0.0
      %2780 = vmatpush.msra.mxu0 %v2763
      %2781 = vmatmul.f32.gmra.mxu0 %v2655
      %v2782 = vpop.f32.mrf.mxu0
      %v2783 = vadd.f32 0.0, %v2782
      %2784 = vmatmul.f32.gmra.mxu0 %v2658
      %v2785 = vpop.f32.mrf.mxu0
      %v2786 = vadd.f32 0.0, %v2785
      %2787 = vmatmul.f32.gmra.mxu0 %v2661
      %v2788 = vpop.f32.mrf.mxu0
      %v2789 = vadd.f32 0.0, %v2788
      %2790 = vmatmul.f32.gmra.mxu0 %v2664
      %v2791 = vpop.f32.mrf.mxu0
      %v2792 = vadd.f32 0.0, %v2791
      %2793 = vmatmul.f32.gmra.mxu0 %v2667
      %v2794 = vpop.f32.mrf.mxu0
      %v2795 = vadd.f32 0.0, %v2794
      %2796 = vmatmul.f32.gmra.mxu0 %v2670
      %v2797 = vpop.f32.mrf.mxu0
      %v2798 = vadd.f32 0.0, %v2797
      %2799 = vmatmul.f32.gmra.mxu0 %v2673
      %v2800 = vpop.f32.mrf.mxu0
      %v2801 = vadd.f32 0.0, %v2800
      %2802 = vmatmul.f32.gmra.mxu0 %v2676
      %v2803 = vpop.f32.mrf.mxu0
      %v2804 = vadd.f32 0.0, %v2803
      %2805 = vmatmul.f32.gmra.mxu0 %v2679
      %v2806 = vpop.f32.mrf.mxu0
      %v2807 = vadd.f32 0.0, %v2806
      %2808 = vmatmul.f32.gmra.mxu0 %v2682
      %v2809 = vpop.f32.mrf.mxu0
      %v2810 = vadd.f32 0.0, %v2809
      %2811 = vmatmul.f32.gmra.mxu0 %v2685
      %v2812 = vpop.f32.mrf.mxu0
      %v2813 = vadd.f32 0.0, %v2812
      %2814 = vmatmul.f32.gmra.mxu0 %v2688
      %v2815 = vpop.f32.mrf.mxu0
      %v2816 = vadd.f32 0.0, %v2815
      %2817 = vmatmul.f32.gmra.mxu0 %v2691
      %v2818 = vpop.f32.mrf.mxu0
      %v2819 = vadd.f32 0.0, %v2818
      %2820 = vmatmul.f32.gmra.mxu0 %v2694
      %v2821 = vpop.f32.mrf.mxu0
      %v2822 = vadd.f32 0.0, %v2821
      %2823 = vmatmul.f32.gmra.mxu0 %v2697
      %v2824 = vpop.f32.mrf.mxu0
      %v2825 = vadd.f32 0.0, %v2824
      %2826 = vmatmul.f32.gmra.mxu0 %v2700
      %v2827 = vpop.f32.mrf.mxu0
      %v2828 = vadd.f32 0.0, %v2827
      %2829 = vmatmul.f32.gmra.mxu0 %v2703
      %v2830 = vpop.f32.mrf.mxu0
      %v2831 = vadd.f32 0.0, %v2830
      %2832 = vmatmul.f32.gmra.mxu0 %v2706
      %v2833 = vpop.f32.mrf.mxu0
      %v2834 = vadd.f32 0.0, %v2833
      %2835 = vmatmul.f32.gmra.mxu0 %v2709
      %v2836 = vpop.f32.mrf.mxu0
      %v2837 = vadd.f32 0.0, %v2836
      %2838 = vmatmul.f32.gmra.mxu0 %v2712
      %v2839 = vpop.f32.mrf.mxu0
      %v2840 = vadd.f32 0.0, %v2839
      %2841 = vmatmul.f32.gmra.mxu0 %v2715
      %v2842 = vpop.f32.mrf.mxu0
      %v2843 = vadd.f32 0.0, %v2842
      %2844 = vmatmul.f32.gmra.mxu0 %v2718
      %v2845 = vpop.f32.mrf.mxu0
      %v2846 = vadd.f32 0.0, %v2845
      %2847 = vmatmul.f32.gmra.mxu0 %v2721
      %v2848 = vpop.f32.mrf.mxu0
      %v2849 = vadd.f32 0.0, %v2848
      %2850 = vmatmul.f32.gmra.mxu0 %v2724
      %v2851 = vpop.f32.mrf.mxu0
      %v2852 = vadd.f32 0.0, %v2851
      %2853 = vmatmul.f32.gmra.mxu0 %v2727
      %v2854 = vpop.f32.mrf.mxu0
      %v2855 = vadd.f32 0.0, %v2854
      %2856 = vmatmul.f32.gmra.mxu0 %v2730
      %v2857 = vpop.f32.mrf.mxu0
      %v2858 = vadd.f32 0.0, %v2857
      %2859 = vmatmul.f32.gmra.mxu0 %v2733
      %v2860 = vpop.f32.mrf.mxu0
      %v2861 = vadd.f32 0.0, %v2860
      %2862 = vmatmul.f32.gmra.mxu0 %v2736
      %v2863 = vpop.f32.mrf.mxu0
      %v2864 = vadd.f32 0.0, %v2863
      %2865 = vmatmul.f32.gmra.mxu0 %v2739
      %v2866 = vpop.f32.mrf.mxu0
      %v2867 = vadd.f32 0.0, %v2866
      %2868 = vmatmul.f32.gmra.mxu0 %v2742
      %v2869 = vpop.f32.mrf.mxu0
      %v2870 = vadd.f32 0.0, %v2869
      %2871 = vmatmul.f32.gmra.mxu0 %v2745
      %v2872 = vpop.f32.mrf.mxu0
      %v2873 = vadd.f32 0.0, %v2872
      %2874 = vmatmul.f32.gmra.mxu0 %v2748
      %v2875 = vpop.f32.mrf.mxu0
      %v2876 = vadd.f32 0.0, %v2875
      %2877 = vmatmul.f32.gmra.mxu0 %v2751
      %v2878 = vpop.f32.mrf.mxu0
      %v2879 = vadd.f32 0.0, %v2878
      %2880 = vmatmul.f32.gmra.mxu0 %v2754
      %v2881 = vpop.f32.mrf.mxu0
      %v2882 = vadd.f32 0.0, %v2881
      %2883 = vmatmul.f32.gmra.mxu0 %v2757
      %v2884 = vpop.f32.mrf.mxu0
      %v2885 = vadd.f32 0.0, %v2884
      %2886 = vmatmul.f32.gmra.mxu0 %v2760
      %v2887 = vpop.f32.mrf.mxu0
      %v2888 = vadd.f32 0.0, %v2887
      %2889 = vdwg.mxu0
      %v2890 = vadd.f32 %v2580, %v2783
      %v2891 = vadd.f32 %v2581, %v2786
      %v2892 = vadd.f32 %v2582, %v2789
      %v2893 = vadd.f32 %v2583, %v2792
      %v2894 = vadd.f32 %v2584, %v2795
      %v2895 = vadd.f32 %v2585, %v2798
      %v2896 = vadd.f32 %v2586, %v2801
      %v2897 = vadd.f32 %v2587, %v2804
      %v2898 = vadd.f32 %v2588, %v2807
      %v2899 = vadd.f32 %v2589, %v2810
      %v2900 = vadd.f32 %v2590, %v2813
      %v2901 = vadd.f32 %v2591, %v2816
      %v2902 = vadd.f32 %v2592, %v2819
      %v2903 = vadd.f32 %v2593, %v2822
      %v2904 = vadd.f32 %v2594, %v2825
      %v2905 = vadd.f32 %v2595, %v2828
      %v2906 = vadd.f32 %v2596, %v2831
      %v2907 = vadd.f32 %v2597, %v2834
      %v2908 = vadd.f32 %v2598, %v2837
      %v2909 = vadd.f32 %v2599, %v2840
      %v2910 = vadd.f32 %v2600, %v2843
      %v2911 = vadd.f32 %v2601, %v2846
      %v2912 = vadd.f32 %v2602, %v2849
      %v2913 = vadd.f32 %v2603, %v2852
      %v2914 = vadd.f32 %v2604, %v2855
      %v2915 = vadd.f32 %v2605, %v2858
      %v2916 = vadd.f32 %v2606, %v2861
      %v2917 = vadd.f32 %v2607, %v2864
      %v2918 = vadd.f32 %v2608, %v2867
      %v2919 = vadd.f32 %v2609, %v2870
      %v2920 = vadd.f32 %v2610, %v2873
      %v2921 = vadd.f32 %v2611, %v2876
      %v2922 = vadd.f32 %v2612, %v2879
      %v2923 = vadd.f32 %v2613, %v2882
      %v2924 = vadd.f32 %v2614, %v2885
      %v2925 = vadd.f32 %v2615, %v2888
      %v2926 = vld [vmem:[%s2] sm:$0x1]
      %v2928 = vperm.slane %v2926, 0
      %v2930 = vadd.f32 %v2890, %v2928
      %v2931 = vadd.f32 %v2891, %v2928
      %v2932 = vadd.f32 %v2892, %v2928
      %v2933 = vadd.f32 %v2893, %v2928
      %v2934 = vadd.f32 %v2894, %v2928
      %v2935 = vadd.f32 %v2895, %v2928
      %v2936 = vadd.f32 %v2896, %v2928
      %v2937 = vadd.f32 %v2897, %v2928
      %v2938 = vadd.f32 %v2898, %v2928
      %v2939 = vadd.f32 %v2899, %v2928
      %v2940 = vadd.f32 %v2900, %v2928
      %v2941 = vadd.f32 %v2901, %v2928
      %v2942 = vadd.f32 %v2902, %v2928
      %v2943 = vadd.f32 %v2903, %v2928
      %v2944 = vadd.f32 %v2904, %v2928
      %v2945 = vadd.f32 %v2905, %v2928
      %v2946 = vadd.f32 %v2906, %v2928
      %v2947 = vadd.f32 %v2907, %v2928
      %v2948 = vadd.f32 %v2908, %v2928
      %v2949 = vadd.f32 %v2909, %v2928
      %v2950 = vadd.f32 %v2910, %v2928
      %v2951 = vadd.f32 %v2911, %v2928
      %v2952 = vadd.f32 %v2912, %v2928
      %v2953 = vadd.f32 %v2913, %v2928
      %v2954 = vadd.f32 %v2914, %v2928
      %v2955 = vadd.f32 %v2915, %v2928
      %v2956 = vadd.f32 %v2916, %v2928
      %v2957 = vadd.f32 %v2917, %v2928
      %v2958 = vadd.f32 %v2918, %v2928
      %v2959 = vadd.f32 %v2919, %v2928
      %v2960 = vadd.f32 %v2920, %v2928
      %v2961 = vadd.f32 %v2921, %v2928
      %v2962 = vadd.f32 %v2922, %v2928
      %v2963 = vadd.f32 %v2923, %v2928
      %v2964 = vadd.f32 %v2924, %v2928
      %v2965 = vadd.f32 %v2925, %v2928
      %v2966 = vmax.f32 %v2930, 0.0
      %v2967 = vmax.f32 %v2931, 0.0
      %v2968 = vmax.f32 %v2932, 0.0
      %v2969 = vmax.f32 %v2933, 0.0
      %v2970 = vmax.f32 %v2934, 0.0
      %v2971 = vmax.f32 %v2935, 0.0
      %v2972 = vmax.f32 %v2936, 0.0
      %v2973 = vmax.f32 %v2937, 0.0
      %v2974 = vmax.f32 %v2938, 0.0
      %v2975 = vmax.f32 %v2939, 0.0
      %v2976 = vmax.f32 %v2940, 0.0
      %v2977 = vmax.f32 %v2941, 0.0
      %v2978 = vmax.f32 %v2942, 0.0
      %v2979 = vmax.f32 %v2943, 0.0
      %v2980 = vmax.f32 %v2944, 0.0
      %v2981 = vmax.f32 %v2945, 0.0
      %v2982 = vmax.f32 %v2946, 0.0
      %v2983 = vmax.f32 %v2947, 0.0
      %v2984 = vmax.f32 %v2948, 0.0
      %v2985 = vmax.f32 %v2949, 0.0
      %v2986 = vmax.f32 %v2950, 0.0
      %v2987 = vmax.f32 %v2951, 0.0
      %v2988 = vmax.f32 %v2952, 0.0
      %v2989 = vmax.f32 %v2953, 0.0
      %v2990 = vmax.f32 %v2954, 0.0
      %v2991 = vmax.f32 %v2955, 0.0
      %v2992 = vmax.f32 %v2956, 0.0
      %v2993 = vmax.f32 %v2957, 0.0
      %v2994 = vmax.f32 %v2958, 0.0
      %v2995 = vmax.f32 %v2959, 0.0
      %v2996 = vmax.f32 %v2960, 0.0
      %v2997 = vmax.f32 %v2961, 0.0
      %v2998 = vmax.f32 %v2962, 0.0
      %v2999 = vmax.f32 %v2963, 0.0
      %v3000 = vmax.f32 %v2964, 0.0
      %v3001 = vmax.f32 %v2965, 0.0
      %v3002 = vmin.f32 %v2966, 6.0
      %v3003 = vmin.f32 %v2967, 6.0
      %v3004 = vmin.f32 %v2968, 6.0
      %v3005 = vmin.f32 %v2969, 6.0
      %v3006 = vmin.f32 %v2970, 6.0
      %v3007 = vmin.f32 %v2971, 6.0
      %v3008 = vmin.f32 %v2972, 6.0
      %v3009 = vmin.f32 %v2973, 6.0
      %v3010 = vmin.f32 %v2974, 6.0
      %v3011 = vmin.f32 %v2975, 6.0
      %v3012 = vmin.f32 %v2976, 6.0
      %v3013 = vmin.f32 %v2977, 6.0
      %v3014 = vmin.f32 %v2978, 6.0
      %v3015 = vmin.f32 %v2979, 6.0
      %v3016 = vmin.f32 %v2980, 6.0
      %v3017 = vmin.f32 %v2981, 6.0
      %v3018 = vmin.f32 %v2982, 6.0
      %v3019 = vmin.f32 %v2983, 6.0
      %v3020 = vmin.f32 %v2984, 6.0
      %v3021 = vmin.f32 %v2985, 6.0
      %v3022 = vmin.f32 %v2986, 6.0
      %v3023 = vmin.f32 %v2987, 6.0
      %v3024 = vmin.f32 %v2988, 6.0
      %v3025 = vmin.f32 %v2989, 6.0
      %v3026 = vmin.f32 %v2990, 6.0
      %v3027 = vmin.f32 %v2991, 6.0
      %v3028 = vmin.f32 %v2992, 6.0
      %v3029 = vmin.f32 %v2993, 6.0
      %v3030 = vmin.f32 %v2994, 6.0
      %v3031 = vmin.f32 %v2995, 6.0
      %v3032 = vmin.f32 %v2996, 6.0
      %v3033 = vmin.f32 %v2997, 6.0
      %v3034 = vmin.f32 %v2998, 6.0
      %v3035 = vmin.f32 %v2999, 6.0
      %v3036 = vmin.f32 %v3000, 6.0
      %v3037 = vmin.f32 %v3001, 6.0
      %3038 = vst [vmem:[%s206] sm:$0xff] %v3002
      %3039 = vst [vmem:[%s206 + $0x8] sm:$0xff] %v3003
      %3040 = vst [vmem:[%s206 + $0x10] sm:$0xff] %v3004
      %3041 = vst [vmem:[%s206 + $0x18] sm:$0xff] %v3005
      %3042 = vst [vmem:[%s206 + $0x20] sm:$0xff] %v3006
      %3043 = vst [vmem:[%s206 + $0x28] sm:$0xff] %v3007
      %3044 = vst [vmem:[%s206 + $0x30] sm:$0xff] %v3008
      %3045 = vst [vmem:[%s206 + $0x38] sm:$0xff] %v3009
      %3046 = vst [vmem:[%s206 + $0x40] sm:$0xff] %v3010
      %3047 = vst [vmem:[%s206 + $0x48] sm:$0xff] %v3011
      %3048 = vst [vmem:[%s206 + $0x50] sm:$0xff] %v3012
      %3049 = vst [vmem:[%s206 + $0x58] sm:$0xff] %v3013
      %3050 = vst [vmem:[%s206 + $0x60] sm:$0xff] %v3014
      %3051 = vst [vmem:[%s206 + $0x68] sm:$0xff] %v3015
      %3052 = vst [vmem:[%s206 + $0x70] sm:$0xff] %v3016
      %3053 = vst [vmem:[%s206 + $0x78] sm:$0xff] %v3017
      %3054 = vst [vmem:[%s206 + $0x80] sm:$0xff] %v3018
      %3055 = vst [vmem:[%s206 + $0x88] sm:$0xff] %v3019
      %3056 = vst [vmem:[%s206 + $0x90] sm:$0xff] %v3020
      %3057 = vst [vmem:[%s206 + $0x98] sm:$0xff] %v3021
      %3058 = vst [vmem:[%s206 + $0xa0] sm:$0xff] %v3022
      %3059 = vst [vmem:[%s206 + $0xa8] sm:$0xff] %v3023
      %3060 = vst [vmem:[%s206 + $0xb0] sm:$0xff] %v3024
      %3061 = vst [vmem:[%s206 + $0xb8] sm:$0xff] %v3025
      %3062 = vst [vmem:[%s206 + $0xc0] sm:$0xff] %v3026
      %3063 = vst [vmem:[%s206 + $0xc8] sm:$0xff] %v3027
      %3064 = vst [vmem:[%s206 + $0xd0] sm:$0xff] %v3028
      %3065 = vst [vmem:[%s206 + $0xd8] sm:$0xff] %v3029
      %3066 = vst [vmem:[%s206 + $0xe0] sm:$0xff] %v3030
      %3067 = vst [vmem:[%s206 + $0xe8] sm:$0xff] %v3031
      %3068 = vst [vmem:[%s206 + $0xf0] sm:$0xff] %v3032
      %3069 = vst [vmem:[%s206 + $0xf8] sm:$0xff] %v3033
      %3070 = vst [vmem:[%s206 + $0x100] sm:$0xff] %v3034
      %3071 = vst [vmem:[%s206 + $0x108] sm:$0xff] %v3035
      %3072 = vst [vmem:[%s206 + $0x110] sm:$0xff] %v3036
      %3073 = vst [vmem:[%s206 + $0x118] sm:$0xff] %v3037
      %p3074 = scmp.lt.s32.totalorder %s18, 1
      %s3075 = scalar_select %p3074, %s18, 1
      %p3076 = scmp.lt.s32.totalorder %s19, 0
      %s3077 = scalar_select %p3076, %s19, 0
      %s3078 = smul.addr %s3077, 36
      %s3079 = smul.addr %s3075, 36
      %s3080 = sadd.s32 %s3078, %s3079
      %s3081 = smul.addr %s3080, 8
      %s3082 = scalar_lea.vmem %s3, %s3081
      // Predicated region
      $region33: #{repvgg_block_compact_forward.1} parent=31 // pred_check
        %p3083 = pneg %p116
      $region34: #{repvgg_block_compact_forward.1} parent=31 // pred_check_branch
        %3085 = sbr.rel (%p3083) target = $region36
      $region35: #{repvgg_block_compact_forward.1} parent=31 // pred_region
        _
      $region36: #{repvgg_block_compact_forward.1} parent=31 // pred_fallthru
        _
    $region32: #{repvgg_block_compact_forward.1} parent=5 // pred_fallthru
      _
    %p3086 = scmp.le.s32.totalorder 2, %s9
    // Predicated region
    $region37: #{repvgg_block_compact_forward.1} parent=5 // pred_check
      %p3087 = pneg %p3086
    $region38: #{repvgg_block_compact_forward.1} parent=5 // pred_check_branch
      %3089 = sbr.rel (%p3087) target = $region40
    $region39: #{repvgg_block_compact_forward.1} parent=5 // pred_region
      %s3090 = ssub.s32 %s9, 2
      // Predicated region
      $region41: #{repvgg_block_compact_forward.1} parent=39 // pred_check
        %p3091 = pneg %p122
      $region42: #{repvgg_block_compact_forward.1} parent=39 // pred_check_branch
        %3093 = sbr.rel (%p3091) target = $region44
      $region43: #{repvgg_block_compact_forward.1} parent=39 // pred_region
        %p3094 = scmp.lt.s32.totalorder %s20, 1
        %s3095 = scalar_select %p3094, %s20, 1
        %p3096 = scmp.lt.s32.totalorder %s21, 0
        %s3097 = scalar_select %p3096, %s21, 0
        %s3098 = smul.addr %s3097, 36
        %s3099 = smul.addr %s3095, 36
        %s3100 = sadd.s32 %s3098, %s3099
        %s3101 = smul.addr %s3100, 8
        %s3102 = scalar_lea.vmem %s3, %s3101
      $region44: #{repvgg_block_compact_forward.1} parent=39 // pred_fallthru
        _
    $region40: #{repvgg_block_compact_forward.1} parent=5 // pred_fallthru
      _
  $region6: #{repvgg_block_compact_forward.1} parent=0 // loop_footer
    %s13 = sadd.s32 1, %s9
  $region7: #{repvgg_block_compact_forward.1} parent=0 // loop_footer_branch
    %8 = sbr.rel target = $region3
  $region8: #{repvgg_block_compact_forward.1} parent=0 // loop_exit
    _

</llo_original>
